<compile_context>
chip_gen: v6e
topology: v6e:2x2x1
jax: 0.10.0
libtpu: 0.0.40
codegen_flags: <defaults>
</compile_context>

<pallas_src>
import functools
import math

import jax
import jax.numpy as jnp
import numpy as np
from jax import lax
from jax.experimental import pallas as pl
from jax.experimental.pallas import tpu as pltpu

_NEG_INF = float("-inf")


def _layernorm(v, gamma, beta, eps=1e-5):
    mean = jnp.mean(v, axis=-1, keepdims=True)
    var = jnp.mean((v - mean) ** 2, axis=-1, keepdims=True)  # unbiased=False
    return (v - mean) * lax.rsqrt(var + eps) * gamma + beta


def _gelu_tanh(x):
    c = jnp.float32(math.sqrt(2.0 / math.pi))
    return 0.5 * x * (1.0 + jnp.tanh(c * (x + 0.044715 * x * x * x)))


def _split_heads(x2d, num_heads, head_dim):
    # (T, D) -> (num_heads, T, head_dim) via static lane slices + leading concat
    parts = [x2d[:, h * head_dim:(h + 1) * head_dim][None, :, :]
             for h in range(num_heads)]
    return jnp.concatenate(parts, axis=0)


def _merge_heads(x3d, num_heads):
    # (num_heads, T, head_dim) -> (T, D)
    return jnp.concatenate([x3d[h] for h in range(num_heads)], axis=1)


def transformer_block_kernel(
    x_ref,                      # (S, D)  f32 full-sequence slab for this batch
    wq_ref, bq_ref,             # (D, D)  bf16, (1, D)  f32
    wkv_ref, bkv_ref,           # (D, 2D) bf16, (1, 2D) f32  (fused K|V)
    wo_ref, bo_ref,             # (D, D)  bf16, (1, D)  f32
    g1_ref, s1_ref, g2_ref, s2_ref,   # LayerNorm params, (1, D) f32
    w1_ref, b1_ref,             # (D, H)  bf16, (1, H)  f32
    w2_ref, b2_ref,             # (H, D)  bf16, (1, D)  f32
    o_ref,                      # (TQ, D) output tile
    *, num_heads, ffn_chunk,
):
    TQ, D = o_ref.shape
    nh = num_heads
    hd = D // nh
    H = w1_ref.shape[1]
    bf16 = jnp.bfloat16
    f32 = jnp.float32

    qi = pl.program_id(1)
    q_start = pl.multiple_of(qi * TQ, TQ)

    # Residual input rows for this q tile.
    x_q = x_ref[pl.ds(q_start, TQ), :]

    # ---------------- attention sub-block ----------------
    h_q = _layernorm(x_q, g1_ref[...], s1_ref[...])
    q = jnp.dot(h_q.astype(bf16), wq_ref[...],
                preferred_element_type=f32) + bq_ref[...]          # (TQ, D) f32
    q_h = _split_heads(q.astype(bf16), nh, hd)                      # (nh, TQ, hd)

    scale = jnp.float32(1.0 / math.sqrt(hd))
    row = lax.broadcasted_iota(jnp.int32, (TQ, TQ), 0)
    col = lax.broadcasted_iota(jnp.int32, (TQ, TQ), 1)

    def kv_step(kv, carry):
        m, l, acc = carry
        k_start = pl.multiple_of(kv * TQ, TQ)
        x_k = x_ref[pl.ds(k_start, TQ), :]
        h_k = _layernorm(x_k, g1_ref[...], s1_ref[...])
        kvp = jnp.dot(h_k.astype(bf16), wkv_ref[...],
                      preferred_element_type=f32) + bkv_ref[...]    # (TQ, 2D)
        kvp = kvp.astype(bf16)
        k_h = _split_heads(kvp[:, :D], nh, hd)                      # (nh, TQ, hd)
        v_h = _split_heads(kvp[:, D:], nh, hd)

        # Batched over heads, contracting head_dim: (nh, TQ, TQ) scores.
        s = lax.dot_general(q_h, k_h, (((2,), (2,)), ((0,), (0,))),
                            preferred_element_type=f32) * scale
        # Causal mask by absolute position; strictly-upper tiles are already
        # skipped by the loop bound (kv <= qi), so this only trims the diagonal.
        mask = (kv * TQ + col) <= (qi * TQ + row)
        s = jnp.where(mask[None, :, :], s, _NEG_INF)

        m_new = jnp.maximum(m, jnp.max(s, axis=-1, keepdims=True))
        alpha = jnp.exp(m - m_new)
        p = jnp.exp(s - m_new)
        l_new = alpha * l + jnp.sum(p, axis=-1, keepdims=True)
        ctx = lax.dot_general(p.astype(bf16), v_h,
                              (((2,), (1,)), ((0,), (0,))),
                              preferred_element_type=f32)           # (nh, TQ, hd)
        acc_new = alpha * acc + ctx
        return m_new, l_new, acc_new

    m0 = jnp.full((nh, TQ, 1), _NEG_INF, f32)
    l0 = jnp.zeros((nh, TQ, 1), f32)
    a0 = jnp.zeros((nh, TQ, hd), f32)
    # Only kv tiles 0..qi are needed (causal) -> ~2x fewer attention FLOPs.
    m, l, acc = lax.fori_loop(0, qi + 1, kv_step, (m0, l0, a0))

    acc = acc * pl.reciprocal(l, approx=True)
    ctx2d = _merge_heads(acc, nh)                                   # (TQ, D) f32
    attn_out = jnp.dot(ctx2d.astype(bf16), wo_ref[...],
                       preferred_element_type=f32) + bo_ref[...]

    x1 = x_q + attn_out                     # dropout(rate=0) == identity

    # ---------------- feed-forward sub-block ----------------
    h2 = _layernorm(x1, g2_ref[...], s2_ref[...]).astype(bf16)      # (TQ, D)

    if ffn_chunk == H:
        h1 = jnp.dot(h2, w1_ref[...], preferred_element_type=f32) + b1_ref[...]
        h1 = _gelu_tanh(h1)
        ff = jnp.dot(h1.astype(bf16), w2_ref[...], preferred_element_type=f32)
    else:
        n_chunks = H // ffn_chunk

        def ffn_step(c, acc_ff):
            c_start = pl.multiple_of(c * ffn_chunk, ffn_chunk)
            w1c = w1_ref[:, pl.ds(c_start, ffn_chunk)]
            b1c = b1_ref[:, pl.ds(c_start, ffn_chunk)]
            h1c = jnp.dot(h2, w1c, preferred_element_type=f32) + b1c
            h1c = _gelu_tanh(h1c)
            w2c = w2_ref[pl.ds(c_start, ffn_chunk), :]
            return acc_ff + jnp.dot(h1c.astype(bf16), w2c,
                                    preferred_element_type=f32)

        ff = lax.fori_loop(0, n_chunks, ffn_step, jnp.zeros((TQ, D), f32))

    ff = ff + b2_ref[...]
    o_ref[...] = (x1 + ff).astype(o_ref.dtype)


def transformer_block(x, params, num_heads):
    (wq, bq, wk, bk, wv, bv, wo, bo, g1, s1, g2, s2, w1, b1, w2, b2) = params
    B, S, D = x.shape
    H = w1.shape[1]
    assert D % num_heads == 0, "emb_dim must be divisible by num_heads"

    # Sequence tile (q and kv tiles share one size). 256 is MXU-friendly on
    # v6e/v7x; fall back to the whole sequence for small/odd S.
    if S % 256 == 0:
        TQ = 256
    elif S % 128 == 0:
        TQ = 128
    else:
        TQ = S
    n_q = S // TQ

    # FFN hidden-dim chunk: only chunk when H is large and 512-divisible.
    CH = 512 if (H % 512 == 0 and H > 512) else H

    bf16 = jnp.bfloat16
    wq_b = wq.astype(bf16)
    wkv_b = jnp.concatenate([wk, wv], axis=1).astype(bf16)    # (D, 2D)
    bkv = jnp.concatenate([bk, bv], axis=1)                   # (1, 2D)
    wo_b = wo.astype(bf16)
    w1_b = w1.astype(bf16)
    w2_b = w2.astype(bf16)

    args = (x, wq_b, bq, wkv_b, bkv, wo_b, bo,
            g1, s1, g2, s2, w1_b, b1, w2_b, b2)

    def const_spec(shape):
        n = len(shape)
        return pl.BlockSpec(shape, lambda b, qi, _n=n: (0,) * _n)

    in_specs = [
        pl.BlockSpec((None, S, D), lambda b, qi: (b, 0, 0)),  # x slab (per batch)
        const_spec((D, D)), const_spec((1, D)),               # wq, bq
        const_spec((D, 2 * D)), const_spec((1, 2 * D)),       # wkv, bkv
        const_spec((D, D)), const_spec((1, D)),               # wo, bo
        const_spec((1, D)), const_spec((1, D)),               # gamma1, beta1
        const_spec((1, D)), const_spec((1, D)),               # gamma2, beta2
        const_spec((D, H)), const_spec((1, H)),               # w_ff1, b_ff1
        const_spec((H, D)), const_spec((1, D)),               # w_ff2, b_ff2
    ]
    out_specs = pl.BlockSpec((None, TQ, D), lambda b, qi: (b, qi, 0))

    # VMEM budget: weights (constant index -> effectively resident) +
    # double-buffered slab/output tile + in-kernel f32 intermediates.
    def nbytes(a):
        return a.size * a.dtype.itemsize
    weight_bytes = sum(nbytes(a) for a in args[1:])
    act_bytes = 2 * (S * D * 4 + TQ * D * 4)
    interm_bytes = 4 * (2 * num_heads * TQ * TQ
                        + 4 * num_heads * TQ * (D // num_heads)
                        + TQ * (2 * D) + TQ * CH + 8 * TQ * D)
    budget = 2 * weight_bytes + act_bytes + 2 * interm_bytes
    vmem_limit = int(min(max(budget, 16 * 1024 * 1024), 64 * 1024 * 1024))

    kernel = functools.partial(transformer_block_kernel,
                               num_heads=num_heads, ffn_chunk=CH)
    return pl.pallas_call(
        kernel,
        out_shape=jax.ShapeDtypeStruct((B, S, D), x.dtype),
        grid=(B, n_q),
        in_specs=in_specs,
        out_specs=out_specs,
        compiler_params=pltpu.CompilerParams(
            dimension_semantics=("parallel", "parallel"),
            vmem_limit_bytes=vmem_limit),
    )(*args)


def transformer_block_ref(x, params, num_heads):
    """Pure-JAX f32 reference mirroring the PyTorch forward (dropout=0)."""
    (wq, bq, wk, bk, wv, bv, wo, bo, g1, s1, g2, s2, w1, b1, w2, b2) = params
    B, S, D = x.shape
    hd = D // num_heads

    def ln(v, g, s):
        m = jnp.mean(v, axis=-1, keepdims=True)
        va = jnp.mean((v - m) ** 2, axis=-1, keepdims=True)
        return (v - m) / jnp.sqrt(va + 1e-5) * g + s

    shortcut = x
    h = ln(x, g1, s1)
    q = (h @ wq + bq).reshape(B, S, num_heads, hd).transpose(0, 2, 1, 3)
    k = (h @ wk + bk).reshape(B, S, num_heads, hd).transpose(0, 2, 1, 3)
    v = (h @ wv + bv).reshape(B, S, num_heads, hd).transpose(0, 2, 1, 3)
    scores = jnp.einsum('bhqd,bhkd->bhqk', q, k) / np.sqrt(hd)
    mask = jnp.tril(jnp.ones((S, S), bool))
    scores = jnp.where(mask, scores, -jnp.inf)
    p = jax.nn.softmax(scores, axis=-1)
    ctx = jnp.einsum('bhqk,bhkd->bhqd', p, v).transpose(0, 2, 1, 3).reshape(B, S, D)
    x = shortcut + (ctx @ wo + bo)

    shortcut = x
    h = ln(x, g2, s2)
    h1 = h @ w1 + b1
    h1 = 0.5 * h1 * (1.0 + jnp.tanh(np.sqrt(2.0 / np.pi) * (h1 + 0.044715 * h1 ** 3)))
    return shortcut + (h1 @ w2 + b2)


if __name__ == "__main__":
    cfg = dict(emb_dim=32, context_length=8, num_heads=4,
               dropout_rate=0.0, qkv_bias=True)
    B, S, D = 2, cfg["context_length"], cfg["emb_dim"]
    H = 4 * D

    key = jax.random.PRNGKey(0)
    keys = jax.random.split(key, 16)
    f32 = jnp.float32

    wq = 0.05 * jax.random.normal(keys[0], (D, D), f32)
    bq = 0.05 * jax.random.normal(keys[1], (1, D), f32)
    wk = 0.05 * jax.random.normal(keys[2], (D, D), f32)
    bk = 0.05 * jax.random.normal(keys[3], (1, D), f32)
    wv = 0.05 * jax.random.normal(keys[4], (D, D), f32)
    bv = 0.05 * jax.random.normal(keys[5], (1, D), f32)
    wo = 0.05 * jax.random.normal(keys[6], (D, D), f32)
    bo = 0.05 * jax.random.normal(keys[7], (1, D), f32)
    g1 = jnp.ones((1, D), f32)
    s1 = jnp.zeros((1, D), f32)
    g2 = jnp.ones((1, D), f32)
    s2 = jnp.zeros((1, D), f32)
    w1 = 0.05 * jax.random.normal(keys[8], (D, H), f32)
    b1 = 0.05 * jax.random.normal(keys[9], (1, H), f32)
    w2 = 0.05 * jax.random.normal(keys[10], (H, D), f32)
    b2 = 0.05 * jax.random.normal(keys[11], (1, D), f32)
    params = (wq, bq, wk, bk, wv, bv, wo, bo, g1, s1, g2, s2, w1, b1, w2, b2)

    x = jax.random.normal(keys[12], (B, S, D), f32)

    out = transformer_block(x, params, cfg["num_heads"])
    out = jax.block_until_ready(out)

    ref = transformer_block_ref(x, params, cfg["num_heads"])
    # bf16 MXU matmuls (f32 accumulation) + approx reciprocal => loosened tol.
    np.testing.assert_allclose(np.asarray(out), np.asarray(ref),
                               rtol=2e-2, atol=2e-2)
    print("KERNEL_OK")
</pallas_src>

<mosaic_0001>
module attributes {stable_mosaic.version = 11 : i64} {
  func.func @transformer_block_kernel(%arg0: i32, %arg1: i32, %arg2: memref<1x8x32xf32, #tpu.memory_space<vmem>>, %arg3: memref<32x32xbf16, #tpu.memory_space<vmem>>, %arg4: memref<1x32xf32, #tpu.memory_space<vmem>>, %arg5: memref<32x64xbf16, #tpu.memory_space<vmem>>, %arg6: memref<1x64xf32, #tpu.memory_space<vmem>>, %arg7: memref<32x32xbf16, #tpu.memory_space<vmem>>, %arg8: memref<1x32xf32, #tpu.memory_space<vmem>>, %arg9: memref<1x32xf32, #tpu.memory_space<vmem>>, %arg10: memref<1x32xf32, #tpu.memory_space<vmem>>, %arg11: memref<1x32xf32, #tpu.memory_space<vmem>>, %arg12: memref<1x32xf32, #tpu.memory_space<vmem>>, %arg13: memref<32x128xbf16, #tpu.memory_space<vmem>>, %arg14: memref<1x128xf32, #tpu.memory_space<vmem>>, %arg15: memref<128x32xbf16, #tpu.memory_space<vmem>>, %arg16: memref<1x32xf32, #tpu.memory_space<vmem>>, %arg17: memref<1x8x32xf32, #tpu.memory_space<vmem>>) attributes {dimension_semantics = [#tpu.dimension_semantics<parallel>, #tpu.dimension_semantics<parallel>], iteration_bounds = array<i64: 2, 1>, scalar_prefetch = 0 : i64, scratch_operands = 0 : i64, tpu.core_type = #tpu.core_type<tc>, window_params = [{transform_indices = @transform_0, window_bounds = array<i64: 1, 8, 32>}, {pipeline_mode = #tpu.pipeline_mode<synchronous>, transform_indices = @transform_1, window_bounds = array<i64: 32, 32>}, {pipeline_mode = #tpu.pipeline_mode<synchronous>, transform_indices = @transform_2, window_bounds = array<i64: 1, 32>}, {pipeline_mode = #tpu.pipeline_mode<synchronous>, transform_indices = @transform_3, window_bounds = array<i64: 32, 64>}, {pipeline_mode = #tpu.pipeline_mode<synchronous>, transform_indices = @transform_4, window_bounds = array<i64: 1, 64>}, {pipeline_mode = #tpu.pipeline_mode<synchronous>, transform_indices = @transform_5, window_bounds = array<i64: 32, 32>}, {pipeline_mode = #tpu.pipeline_mode<synchronous>, transform_indices = @transform_6, window_bounds = array<i64: 1, 32>}, {pipeline_mode = #tpu.pipeline_mode<synchronous>, transform_indices = @transform_7, window_bounds = array<i64: 1, 32>}, {pipeline_mode = #tpu.pipeline_mode<synchronous>, transform_indices = @transform_8, window_bounds = array<i64: 1, 32>}, {pipeline_mode = #tpu.pipeline_mode<synchronous>, transform_indices = @transform_9, window_bounds = array<i64: 1, 32>}, {pipeline_mode = #tpu.pipeline_mode<synchronous>, transform_indices = @transform_10, window_bounds = array<i64: 1, 32>}, {pipeline_mode = #tpu.pipeline_mode<synchronous>, transform_indices = @transform_11, window_bounds = array<i64: 32, 128>}, {pipeline_mode = #tpu.pipeline_mode<synchronous>, transform_indices = @transform_12, window_bounds = array<i64: 1, 128>}, {pipeline_mode = #tpu.pipeline_mode<synchronous>, transform_indices = @transform_13, window_bounds = array<i64: 128, 32>}, {pipeline_mode = #tpu.pipeline_mode<synchronous>, transform_indices = @transform_14, window_bounds = array<i64: 1, 32>}, {transform_indices = @transform_15, window_bounds = array<i64: 1, 8, 32>}]} {
    %c8_i32 = arith.constant 8 : i32
    %0 = arith.muli %arg1, %c8_i32 : i32
    %1 = tpu.assume_multiple %0, 8 : i32
    %c0 = arith.constant 0 : index
    %2 = arith.index_cast %1 : i32 to index
    %c0_0 = arith.constant 0 : index
    %3 = vector.load %arg2[%c0, %2, %c0_0] : memref<1x8x32xf32, #tpu.memory_space<vmem>>, vector<1x8x32xf32>
    %4 = vector.shape_cast %3 : vector<1x8x32xf32> to vector<8x32xf32>
    %c0_1 = arith.constant 0 : index
    %c0_2 = arith.constant 0 : index
    %5 = vector.load %arg9[%c0_1, %c0_2] : memref<1x32xf32, #tpu.memory_space<vmem>>, vector<1x32xf32>
    %c0_3 = arith.constant 0 : index
    %c0_4 = arith.constant 0 : index
    %6 = vector.load %arg10[%c0_3, %c0_4] : memref<1x32xf32, #tpu.memory_space<vmem>>, vector<1x32xf32>
    %cst = arith.constant dense<0.000000e+00> : vector<8xf32>
    %7 = vector.multi_reduction <add>, %4, %cst [1] : vector<8x32xf32> to vector<8xf32>
    %8 = vector.shape_cast %7 : vector<8xf32> to vector<8x1xf32>
    %cst_5 = arith.constant 3.200000e+01 : f32
    %9 = vector.broadcast %cst_5 : f32 to vector<8x1xf32>
    %10 = arith.divf %8, %9 : vector<8x1xf32>
    %11 = vector.broadcast %10 : vector<8x1xf32> to vector<8x32xf32>
    %12 = arith.subf %4, %11 : vector<8x32xf32>
    %13 = arith.mulf %12, %12 : vector<8x32xf32>
    %cst_6 = arith.constant dense<0.000000e+00> : vector<8xf32>
    %14 = vector.multi_reduction <add>, %13, %cst_6 [1] : vector<8x32xf32> to vector<8xf32>
    %15 = vector.shape_cast %14 : vector<8xf32> to vector<8x1xf32>
    %cst_7 = arith.constant 3.200000e+01 : f32
    %16 = vector.broadcast %cst_7 : f32 to vector<8x1xf32>
    %17 = arith.divf %15, %16 : vector<8x1xf32>
    %18 = vector.broadcast %10 : vector<8x1xf32> to vector<8x32xf32>
    %19 = arith.subf %4, %18 : vector<8x32xf32>
    %cst_8 = arith.constant 9.99999974E-6 : f32
    %20 = vector.broadcast %cst_8 : f32 to vector<8x1xf32>
    %21 = arith.addf %17, %20 : vector<8x1xf32>
    %22 = math.rsqrt %21 : vector<8x1xf32>
    %23 = vector.broadcast %22 : vector<8x1xf32> to vector<8x32xf32>
    %24 = arith.mulf %19, %23 : vector<8x32xf32>
    %25 = vector.broadcast %5 : vector<1x32xf32> to vector<8x32xf32>
    %26 = arith.mulf %24, %25 : vector<8x32xf32>
    %27 = vector.broadcast %6 : vector<1x32xf32> to vector<8x32xf32>
    %28 = arith.addf %26, %27 : vector<8x32xf32>
    %29 = arith.truncf %28 : vector<8x32xf32> to vector<8x32xbf16>
    %c0_9 = arith.constant 0 : index
    %c0_10 = arith.constant 0 : index
    %30 = vector.load %arg3[%c0_9, %c0_10] : memref<32x32xbf16, #tpu.memory_space<vmem>>, vector<32x32xbf16>
    %cst_11 = arith.constant dense<0.000000e+00> : vector<8x32xf32>
    %31 = tpu.matmul %29, %30, %cst_11 {dimension_numbers = #tpu.dot_dimension_numbers<[1], [0], [0], [1], [0, 0, 1, 1], [], []>} : vector<8x32xbf16>, vector<32x32xbf16>, vector<8x32xf32> -> vector<8x32xf32>
    %c0_12 = arith.constant 0 : index
    %c0_13 = arith.constant 0 : index
    %32 = vector.load %arg4[%c0_12, %c0_13] : memref<1x32xf32, #tpu.memory_space<vmem>>, vector<1x32xf32>
    %33 = vector.broadcast %32 : vector<1x32xf32> to vector<8x32xf32>
    %34 = arith.addf %31, %33 : vector<8x32xf32>
    %35 = arith.truncf %34 : vector<8x32xf32> to vector<8x32xbf16>
    %36 = vector.extract_strided_slice %35 {offsets = [0, 0], sizes = [8, 8], strides = [1, 1]} : vector<8x32xbf16> to vector<8x8xbf16>
    %37 = vector.shape_cast %36 : vector<8x8xbf16> to vector<1x8x8xbf16>
    %38 = vector.extract_strided_slice %35 {offsets = [0, 8], sizes = [8, 8], strides = [1, 1]} : vector<8x32xbf16> to vector<8x8xbf16>
    %39 = vector.shape_cast %38 : vector<8x8xbf16> to vector<1x8x8xbf16>
    %40 = vector.extract_strided_slice %35 {offsets = [0, 16], sizes = [8, 8], strides = [1, 1]} : vector<8x32xbf16> to vector<8x8xbf16>
    %41 = vector.shape_cast %40 : vector<8x8xbf16> to vector<1x8x8xbf16>
    %42 = vector.extract_strided_slice %35 {offsets = [0, 24], sizes = [8, 8], strides = [1, 1]} : vector<8x32xbf16> to vector<8x8xbf16>
    %43 = vector.shape_cast %42 : vector<8x8xbf16> to vector<1x8x8xbf16>
    %44 = tpu.concatenate %37, %39, %41, %43 in 0 : vector<1x8x8xbf16>, vector<1x8x8xbf16>, vector<1x8x8xbf16>, vector<1x8x8xbf16> -> vector<4x8x8xbf16>
    %45 = tpu.iota {dimensions = array<i32: 0>} : vector<8x8xi32>
    %46 = tpu.iota {dimensions = array<i32: 1>} : vector<8x8xi32>
    %cst_14 = arith.constant 0xFF800000 : f32
    %47 = vector.broadcast %cst_14 : f32 to vector<4x8x1xf32>
    %cst_15 = arith.constant 0.000000e+00 : f32
    %48 = vector.broadcast %cst_15 : f32 to vector<4x8x1xf32>
    %cst_16 = arith.constant 0.000000e+00 : f32
    %49 = vector.broadcast %cst_16 : f32 to vector<4x8x8xf32>
    %c1_i32 = arith.constant 1 : i32
    %50 = arith.addi %arg1, %c1_i32 : i32
    %cst_17 = arith.constant 0.353553385 : f32
    %c0_i32 = arith.constant 0 : i32
    %51 = arith.subi %50, %c0_i32 : i32
    %52 = arith.addi %c0_i32, %51 : i32
    %c1_i32_18 = arith.constant 1 : i32
    %53:3 = scf.for %arg18 = %c0_i32 to %52 step %c1_i32_18 iter_args(%arg19 = %47, %arg20 = %48, %arg21 = %49) -> (vector<4x8x1xf32>, vector<4x8x1xf32>, vector<4x8x8xf32>)  : i32 {
      %c8_i32_50 = arith.constant 8 : i32
      %126 = arith.muli %arg18, %c8_i32_50 : i32
      %127 = tpu.assume_multiple %126, 8 : i32
      %c0_51 = arith.constant 0 : index
      %128 = arith.index_cast %127 : i32 to index
      %c0_52 = arith.constant 0 : index
      %129 = vector.load %arg2[%c0_51, %128, %c0_52] : memref<1x8x32xf32, #tpu.memory_space<vmem>>, vector<1x8x32xf32>
      %130 = vector.shape_cast %129 : vector<1x8x32xf32> to vector<8x32xf32>
      %c0_53 = arith.constant 0 : index
      %c0_54 = arith.constant 0 : index
      %131 = vector.load %arg9[%c0_53, %c0_54] : memref<1x32xf32, #tpu.memory_space<vmem>>, vector<1x32xf32>
      %c0_55 = arith.constant 0 : index
      %c0_56 = arith.constant 0 : index
      %132 = vector.load %arg10[%c0_55, %c0_56] : memref<1x32xf32, #tpu.memory_space<vmem>>, vector<1x32xf32>
      %cst_57 = arith.constant dense<0.000000e+00> : vector<8xf32>
      %133 = vector.multi_reduction <add>, %130, %cst_57 [1] : vector<8x32xf32> to vector<8xf32>
      %134 = vector.shape_cast %133 : vector<8xf32> to vector<8x1xf32>
      %cst_58 = arith.constant 3.200000e+01 : f32
      %135 = vector.broadcast %cst_58 : f32 to vector<8x1xf32>
      %136 = arith.divf %134, %135 : vector<8x1xf32>
      %137 = vector.broadcast %136 : vector<8x1xf32> to vector<8x32xf32>
      %138 = arith.subf %130, %137 : vector<8x32xf32>
      %139 = arith.mulf %138, %138 : vector<8x32xf32>
      %cst_59 = arith.constant dense<0.000000e+00> : vector<8xf32>
      %140 = vector.multi_reduction <add>, %139, %cst_59 [1] : vector<8x32xf32> to vector<8xf32>
      %141 = vector.shape_cast %140 : vector<8xf32> to vector<8x1xf32>
      %cst_60 = arith.constant 3.200000e+01 : f32
      %142 = vector.broadcast %cst_60 : f32 to vector<8x1xf32>
      %143 = arith.divf %141, %142 : vector<8x1xf32>
      %144 = vector.broadcast %136 : vector<8x1xf32> to vector<8x32xf32>
      %145 = arith.subf %130, %144 : vector<8x32xf32>
      %cst_61 = arith.constant 9.99999974E-6 : f32
      %146 = vector.broadcast %cst_61 : f32 to vector<8x1xf32>
      %147 = arith.addf %143, %146 : vector<8x1xf32>
      %148 = math.rsqrt %147 : vector<8x1xf32>
      %149 = vector.broadcast %148 : vector<8x1xf32> to vector<8x32xf32>
      %150 = arith.mulf %145, %149 : vector<8x32xf32>
      %151 = vector.broadcast %131 : vector<1x32xf32> to vector<8x32xf32>
      %152 = arith.mulf %150, %151 : vector<8x32xf32>
      %153 = vector.broadcast %132 : vector<1x32xf32> to vector<8x32xf32>
      %154 = arith.addf %152, %153 : vector<8x32xf32>
      %155 = arith.truncf %154 : vector<8x32xf32> to vector<8x32xbf16>
      %c0_62 = arith.constant 0 : index
      %c0_63 = arith.constant 0 : index
      %156 = vector.load %arg5[%c0_62, %c0_63] : memref<32x64xbf16, #tpu.memory_space<vmem>>, vector<32x64xbf16>
      %cst_64 = arith.constant dense<0.000000e+00> : vector<8x64xf32>
      %157 = tpu.matmul %155, %156, %cst_64 {dimension_numbers = #tpu.dot_dimension_numbers<[1], [0], [0], [1], [0, 0, 1, 1], [], []>} : vector<8x32xbf16>, vector<32x64xbf16>, vector<8x64xf32> -> vector<8x64xf32>
      %c0_65 = arith.constant 0 : index
      %c0_66 = arith.constant 0 : index
      %158 = vector.load %arg6[%c0_65, %c0_66] : memref<1x64xf32, #tpu.memory_space<vmem>>, vector<1x64xf32>
      %159 = vector.broadcast %158 : vector<1x64xf32> to vector<8x64xf32>
      %160 = arith.addf %157, %159 : vector<8x64xf32>
      %161 = arith.truncf %160 : vector<8x64xf32> to vector<8x64xbf16>
      %162 = vector.extract_strided_slice %161 {offsets = [0, 0], sizes = [8, 32], strides = [1, 1]} : vector<8x64xbf16> to vector<8x32xbf16>
      %163 = vector.extract_strided_slice %162 {offsets = [0, 0], sizes = [8, 8], strides = [1, 1]} : vector<8x32xbf16> to vector<8x8xbf16>
      %164 = vector.shape_cast %163 : vector<8x8xbf16> to vector<1x8x8xbf16>
      %165 = vector.extract_strided_slice %162 {offsets = [0, 8], sizes = [8, 8], strides = [1, 1]} : vector<8x32xbf16> to vector<8x8xbf16>
      %166 = vector.shape_cast %165 : vector<8x8xbf16> to vector<1x8x8xbf16>
      %167 = vector.extract_strided_slice %162 {offsets = [0, 16], sizes = [8, 8], strides = [1, 1]} : vector<8x32xbf16> to vector<8x8xbf16>
      %168 = vector.shape_cast %167 : vector<8x8xbf16> to vector<1x8x8xbf16>
      %169 = vector.extract_strided_slice %162 {offsets = [0, 24], sizes = [8, 8], strides = [1, 1]} : vector<8x32xbf16> to vector<8x8xbf16>
      %170 = vector.shape_cast %169 : vector<8x8xbf16> to vector<1x8x8xbf16>
      %171 = tpu.concatenate %164, %166, %168, %170 in 0 : vector<1x8x8xbf16>, vector<1x8x8xbf16>, vector<1x8x8xbf16>, vector<1x8x8xbf16> -> vector<4x8x8xbf16>
      %172 = vector.extract_strided_slice %161 {offsets = [0, 32], sizes = [8, 32], strides = [1, 1]} : vector<8x64xbf16> to vector<8x32xbf16>
      %173 = vector.extract_strided_slice %172 {offsets = [0, 0], sizes = [8, 8], strides = [1, 1]} : vector<8x32xbf16> to vector<8x8xbf16>
      %174 = vector.shape_cast %173 : vector<8x8xbf16> to vector<1x8x8xbf16>
      %175 = vector.extract_strided_slice %172 {offsets = [0, 8], sizes = [8, 8], strides = [1, 1]} : vector<8x32xbf16> to vector<8x8xbf16>
      %176 = vector.shape_cast %175 : vector<8x8xbf16> to vector<1x8x8xbf16>
      %177 = vector.extract_strided_slice %172 {offsets = [0, 16], sizes = [8, 8], strides = [1, 1]} : vector<8x32xbf16> to vector<8x8xbf16>
      %178 = vector.shape_cast %177 : vector<8x8xbf16> to vector<1x8x8xbf16>
      %179 = vector.extract_strided_slice %172 {offsets = [0, 24], sizes = [8, 8], strides = [1, 1]} : vector<8x32xbf16> to vector<8x8xbf16>
      %180 = vector.shape_cast %179 : vector<8x8xbf16> to vector<1x8x8xbf16>
      %181 = tpu.concatenate %174, %176, %178, %180 in 0 : vector<1x8x8xbf16>, vector<1x8x8xbf16>, vector<1x8x8xbf16>, vector<1x8x8xbf16> -> vector<4x8x8xbf16>
      %cst_67 = arith.constant dense<0.000000e+00> : vector<4x8x8xf32>
      %182 = tpu.matmul %44, %171, %cst_67 {dimension_numbers = #tpu.dot_dimension_numbers<[2], [2], [1], [1], [0, 0, 0, 1, 1, 1], [0], [0]>} : vector<4x8x8xbf16>, vector<4x8x8xbf16>, vector<4x8x8xf32> -> vector<4x8x8xf32>
      %183 = vector.broadcast %cst_17 : f32 to vector<4x8x8xf32>
      %184 = arith.mulf %182, %183 : vector<4x8x8xf32>
      %c8_i32_68 = arith.constant 8 : i32
      %185 = arith.muli %arg18, %c8_i32_68 : i32
      %186 = vector.broadcast %185 : i32 to vector<8x8xi32>
      %187 = arith.addi %186, %46 : vector<8x8xi32>
      %c8_i32_69 = arith.constant 8 : i32
      %188 = arith.muli %arg1, %c8_i32_69 : i32
      %189 = vector.broadcast %188 : i32 to vector<8x8xi32>
      %190 = arith.addi %189, %45 : vector<8x8xi32>
      %191 = arith.cmpi sle, %187, %190 : vector<8x8xi32>
      %192 = vector.shape_cast %191 : vector<8x8xi1> to vector<1x8x8xi1>
      %cst_70 = arith.constant 0xFF800000 : f32
      %193 = vector.shape_cast %192 : vector<1x8x8xi1> to vector<1x8x8xi1>
      %194 = vector.broadcast %193 : vector<1x8x8xi1> to vector<4x8x8xi1>
      %195 = vector.broadcast %cst_70 : f32 to vector<4x8x8xf32>
      %196 = arith.select %194, %184, %195 : vector<4x8x8xi1>, vector<4x8x8xf32>
      %cst_71 = arith.constant dense<0xFF800000> : vector<4x8xf32>
      %197 = vector.multi_reduction <maximumf>, %196, %cst_71 [2] : vector<4x8x8xf32> to vector<4x8xf32>
      %198 = vector.shape_cast %197 : vector<4x8xf32> to vector<4x8x1xf32>
      %199 = arith.maximumf %arg19, %198 : vector<4x8x1xf32>
      %200 = arith.subf %arg19, %199 : vector<4x8x1xf32>
      %201 = math.exp %200 : vector<4x8x1xf32>
      %202 = vector.broadcast %199 : vector<4x8x1xf32> to vector<4x8x8xf32>
      %203 = arith.subf %196, %202 : vector<4x8x8xf32>
      %204 = math.exp %203 : vector<4x8x8xf32>
      %205 = arith.mulf %201, %arg20 : vector<4x8x1xf32>
      %cst_72 = arith.constant dense<0.000000e+00> : vector<4x8xf32>
      %206 = vector.multi_reduction <add>, %204, %cst_72 [2] : vector<4x8x8xf32> to vector<4x8xf32>
      %207 = vector.shape_cast %206 : vector<4x8xf32> to vector<4x8x1xf32>
      %208 = arith.addf %205, %207 : vector<4x8x1xf32>
      %209 = arith.truncf %204 : vector<4x8x8xf32> to vector<4x8x8xbf16>
      %cst_73 = arith.constant dense<0.000000e+00> : vector<4x8x8xf32>
      %210 = tpu.matmul %209, %181, %cst_73 {dimension_numbers = #tpu.dot_dimension_numbers<[2], [1], [1], [2], [0, 0, 0, 1, 1, 2], [0], [0]>} : vector<4x8x8xbf16>, vector<4x8x8xbf16>, vector<4x8x8xf32> -> vector<4x8x8xf32>
      %211 = vector.broadcast %201 : vector<4x8x1xf32> to vector<4x8x8xf32>
      %212 = arith.mulf %211, %arg21 : vector<4x8x8xf32>
      %213 = arith.addf %212, %210 : vector<4x8x8xf32>
      scf.yield %199, %208, %213 : vector<4x8x1xf32>, vector<4x8x1xf32>, vector<4x8x8xf32>
    }
    %54 = tpu.reciprocal %53#1 {approx = true} : vector<4x8x1xf32> -> vector<4x8x1xf32>
    %55 = vector.broadcast %54 : vector<4x8x1xf32> to vector<4x8x8xf32>
    %56 = arith.mulf %53#2, %55 : vector<4x8x8xf32>
    %57 = vector.extract_strided_slice %56 {offsets = [0, 0, 0], sizes = [1, 8, 8], strides = [1, 1, 1]} : vector<4x8x8xf32> to vector<1x8x8xf32>
    %58 = vector.shape_cast %57 : vector<1x8x8xf32> to vector<8x8xf32>
    %59 = vector.extract_strided_slice %56 {offsets = [1, 0, 0], sizes = [1, 8, 8], strides = [1, 1, 1]} : vector<4x8x8xf32> to vector<1x8x8xf32>
    %60 = vector.shape_cast %59 : vector<1x8x8xf32> to vector<8x8xf32>
    %61 = vector.extract_strided_slice %56 {offsets = [2, 0, 0], sizes = [1, 8, 8], strides = [1, 1, 1]} : vector<4x8x8xf32> to vector<1x8x8xf32>
    %62 = vector.shape_cast %61 : vector<1x8x8xf32> to vector<8x8xf32>
    %63 = vector.extract_strided_slice %56 {offsets = [3, 0, 0], sizes = [1, 8, 8], strides = [1, 1, 1]} : vector<4x8x8xf32> to vector<1x8x8xf32>
    %64 = vector.shape_cast %63 : vector<1x8x8xf32> to vector<8x8xf32>
    %65 = tpu.concatenate %58, %60, %62, %64 in 1 : vector<8x8xf32>, vector<8x8xf32>, vector<8x8xf32>, vector<8x8xf32> -> vector<8x32xf32>
    %66 = arith.truncf %65 : vector<8x32xf32> to vector<8x32xbf16>
    %c0_19 = arith.constant 0 : index
    %c0_20 = arith.constant 0 : index
    %67 = vector.load %arg7[%c0_19, %c0_20] : memref<32x32xbf16, #tpu.memory_space<vmem>>, vector<32x32xbf16>
    %cst_21 = arith.constant dense<0.000000e+00> : vector<8x32xf32>
    %68 = tpu.matmul %66, %67, %cst_21 {dimension_numbers = #tpu.dot_dimension_numbers<[1], [0], [0], [1], [0, 0, 1, 1], [], []>} : vector<8x32xbf16>, vector<32x32xbf16>, vector<8x32xf32> -> vector<8x32xf32>
    %c0_22 = arith.constant 0 : index
    %c0_23 = arith.constant 0 : index
    %69 = vector.load %arg8[%c0_22, %c0_23] : memref<1x32xf32, #tpu.memory_space<vmem>>, vector<1x32xf32>
    %70 = vector.broadcast %69 : vector<1x32xf32> to vector<8x32xf32>
    %71 = arith.addf %68, %70 : vector<8x32xf32>
    %72 = arith.addf %4, %71 : vector<8x32xf32>
    %c0_24 = arith.constant 0 : index
    %c0_25 = arith.constant 0 : index
    %73 = vector.load %arg11[%c0_24, %c0_25] : memref<1x32xf32, #tpu.memory_space<vmem>>, vector<1x32xf32>
    %c0_26 = arith.constant 0 : index
    %c0_27 = arith.constant 0 : index
    %74 = vector.load %arg12[%c0_26, %c0_27] : memref<1x32xf32, #tpu.memory_space<vmem>>, vector<1x32xf32>
    %cst_28 = arith.constant dense<0.000000e+00> : vector<8xf32>
    %75 = vector.multi_reduction <add>, %72, %cst_28 [1] : vector<8x32xf32> to vector<8xf32>
    %76 = vector.shape_cast %75 : vector<8xf32> to vector<8x1xf32>
    %cst_29 = arith.constant 3.200000e+01 : f32
    %77 = vector.broadcast %cst_29 : f32 to vector<8x1xf32>
    %78 = arith.divf %76, %77 : vector<8x1xf32>
    %79 = vector.broadcast %78 : vector<8x1xf32> to vector<8x32xf32>
    %80 = arith.subf %72, %79 : vector<8x32xf32>
    %81 = arith.mulf %80, %80 : vector<8x32xf32>
    %cst_30 = arith.constant dense<0.000000e+00> : vector<8xf32>
    %82 = vector.multi_reduction <add>, %81, %cst_30 [1] : vector<8x32xf32> to vector<8xf32>
    %83 = vector.shape_cast %82 : vector<8xf32> to vector<8x1xf32>
    %cst_31 = arith.constant 3.200000e+01 : f32
    %84 = vector.broadcast %cst_31 : f32 to vector<8x1xf32>
    %85 = arith.divf %83, %84 : vector<8x1xf32>
    %86 = vector.broadcast %78 : vector<8x1xf32> to vector<8x32xf32>
    %87 = arith.subf %72, %86 : vector<8x32xf32>
    %cst_32 = arith.constant 9.99999974E-6 : f32
    %88 = vector.broadcast %cst_32 : f32 to vector<8x1xf32>
    %89 = arith.addf %85, %88 : vector<8x1xf32>
    %90 = math.rsqrt %89 : vector<8x1xf32>
    %91 = vector.broadcast %90 : vector<8x1xf32> to vector<8x32xf32>
    %92 = arith.mulf %87, %91 : vector<8x32xf32>
    %93 = vector.broadcast %73 : vector<1x32xf32> to vector<8x32xf32>
    %94 = arith.mulf %92, %93 : vector<8x32xf32>
    %95 = vector.broadcast %74 : vector<1x32xf32> to vector<8x32xf32>
    %96 = arith.addf %94, %95 : vector<8x32xf32>
    %97 = arith.truncf %96 : vector<8x32xf32> to vector<8x32xbf16>
    %c0_33 = arith.constant 0 : index
    %c0_34 = arith.constant 0 : index
    %98 = vector.load %arg13[%c0_33, %c0_34] : memref<32x128xbf16, #tpu.memory_space<vmem>>, vector<32x128xbf16>
    %cst_35 = arith.constant dense<0.000000e+00> : vector<8x128xf32>
    %99 = tpu.matmul %97, %98, %cst_35 {dimension_numbers = #tpu.dot_dimension_numbers<[1], [0], [0], [1], [0, 0, 1, 1], [], []>} : vector<8x32xbf16>, vector<32x128xbf16>, vector<8x128xf32> -> vector<8x128xf32>
    %c0_36 = arith.constant 0 : index
    %c0_37 = arith.constant 0 : index
    %100 = vector.load %arg14[%c0_36, %c0_37] : memref<1x128xf32, #tpu.memory_space<vmem>>, vector<1x128xf32>
    %101 = vector.broadcast %100 : vector<1x128xf32> to vector<8x128xf32>
    %102 = arith.addf %99, %101 : vector<8x128xf32>
    %cst_38 = arith.constant 5.000000e-01 : f32
    %103 = vector.broadcast %cst_38 : f32 to vector<8x128xf32>
    %104 = arith.mulf %103, %102 : vector<8x128xf32>
    %cst_39 = arith.constant 4.471500e-02 : f32
    %105 = vector.broadcast %cst_39 : f32 to vector<8x128xf32>
    %106 = arith.mulf %105, %102 : vector<8x128xf32>
    %107 = arith.mulf %106, %102 : vector<8x128xf32>
    %108 = arith.mulf %107, %102 : vector<8x128xf32>
    %109 = arith.addf %102, %108 : vector<8x128xf32>
    %cst_40 = arith.constant 0.797884583 : f32
    %110 = vector.broadcast %cst_40 : f32 to vector<8x128xf32>
    %111 = arith.mulf %110, %109 : vector<8x128xf32>
    %112 = math.tanh %111 : vector<8x128xf32>
    %cst_41 = arith.constant 1.000000e+00 : f32
    %113 = vector.broadcast %cst_41 : f32 to vector<8x128xf32>
    %114 = arith.addf %113, %112 : vector<8x128xf32>
    %115 = arith.mulf %104, %114 : vector<8x128xf32>
    %116 = arith.truncf %115 : vector<8x128xf32> to vector<8x128xbf16>
    %c0_42 = arith.constant 0 : index
    %c0_43 = arith.constant 0 : index
    %117 = vector.load %arg15[%c0_42, %c0_43] : memref<128x32xbf16, #tpu.memory_space<vmem>>, vector<128x32xbf16>
    %cst_44 = arith.constant dense<0.000000e+00> : vector<8x32xf32>
    %118 = tpu.matmul %116, %117, %cst_44 {dimension_numbers = #tpu.dot_dimension_numbers<[1], [0], [0], [1], [0, 0, 1, 1], [], []>} : vector<8x128xbf16>, vector<128x32xbf16>, vector<8x32xf32> -> vector<8x32xf32>
    %c0_45 = arith.constant 0 : index
    %c0_46 = arith.constant 0 : index
    %119 = vector.load %arg16[%c0_45, %c0_46] : memref<1x32xf32, #tpu.memory_space<vmem>>, vector<1x32xf32>
    %120 = vector.broadcast %119 : vector<1x32xf32> to vector<8x32xf32>
    %121 = arith.addf %118, %120 : vector<8x32xf32>
    %122 = arith.addf %72, %121 : vector<8x32xf32>
    %c0_47 = arith.constant 0 : index
    %c0_48 = arith.constant 0 : index
    %c0_49 = arith.constant 0 : index
    %123 = vector.load %arg17[%c0_47, %c0_48, %c0_49] : memref<1x8x32xf32, #tpu.memory_space<vmem>>, vector<1x8x32xf32>
    %124 = vector.shape_cast %123 : vector<1x8x32xf32> to vector<8x32xf32>
    %125 = vector.shape_cast %122 : vector<8x32xf32> to vector<1x8x32xf32>
    tpu.vector_store %arg17[%c0_47, %c0_48, %c0_49], %125 {strides = array<i32>} : memref<1x8x32xf32, #tpu.memory_space<vmem>>, vector<1x8x32xf32>,
    return
  }
  func.func @transform_0(%arg0: i32, %arg1: i32) -> (i32, i32, i32) {
    %c0_i32 = arith.constant 0 : i32
    %c0_i32_0 = arith.constant 0 : i32
    %c0_i32_1 = arith.constant 0 : i32
    return %arg0, %c0_i32, %c0_i32_0 : i32, i32, i32
  }
  func.func @transform_1(%arg0: i32, %arg1: i32) -> (i32, i32) {
    %c0_i32 = arith.constant 0 : i32
    %c0_i32_0 = arith.constant 0 : i32
    %c0_i32_1 = arith.constant 0 : i32
    return %c0_i32, %c0_i32_0 : i32, i32
  }
  func.func @transform_2(%arg0: i32, %arg1: i32) -> (i32, i32) {
    %c0_i32 = arith.constant 0 : i32
    %c0_i32_0 = arith.constant 0 : i32
    %c0_i32_1 = arith.constant 0 : i32
    return %c0_i32, %c0_i32_0 : i32, i32
  }
  func.func @transform_3(%arg0: i32, %arg1: i32) -> (i32, i32) {
    %c0_i32 = arith.constant 0 : i32
    %c0_i32_0 = arith.constant 0 : i32
    %c0_i32_1 = arith.constant 0 : i32
    return %c0_i32, %c0_i32_0 : i32, i32
  }
  func.func @transform_4(%arg0: i32, %arg1: i32) -> (i32, i32) {
    %c0_i32 = arith.constant 0 : i32
    %c0_i32_0 = arith.constant 0 : i32
    %c0_i32_1 = arith.constant 0 : i32
    return %c0_i32, %c0_i32_0 : i32, i32
  }
  func.func @transform_5(%arg0: i32, %arg1: i32) -> (i32, i32) {
    %c0_i32 = arith.constant 0 : i32
    %c0_i32_0 = arith.constant 0 : i32
    %c0_i32_1 = arith.constant 0 : i32
    return %c0_i32, %c0_i32_0 : i32, i32
  }
  func.func @transform_6(%arg0: i32, %arg1: i32) -> (i32, i32) {
    %c0_i32 = arith.constant 0 : i32
    %c0_i32_0 = arith.constant 0 : i32
    %c0_i32_1 = arith.constant 0 : i32
    return %c0_i32, %c0_i32_0 : i32, i32
  }
  func.func @transform_7(%arg0: i32, %arg1: i32) -> (i32, i32) {
    %c0_i32 = arith.constant 0 : i32
    %c0_i32_0 = arith.constant 0 : i32
    %c0_i32_1 = arith.constant 0 : i32
    return %c0_i32, %c0_i32_0 : i32, i32
  }
  func.func @transform_8(%arg0: i32, %arg1: i32) -> (i32, i32) {
    %c0_i32 = arith.constant 0 : i32
    %c0_i32_0 = arith.constant 0 : i32
    %c0_i32_1 = arith.constant 0 : i32
    return %c0_i32, %c0_i32_0 : i32, i32
  }
  func.func @transform_9(%arg0: i32, %arg1: i32) -> (i32, i32) {
    %c0_i32 = arith.constant 0 : i32
    %c0_i32_0 = arith.constant 0 : i32
    %c0_i32_1 = arith.constant 0 : i32
    return %c0_i32, %c0_i32_0 : i32, i32
  }
  func.func @transform_10(%arg0: i32, %arg1: i32) -> (i32, i32) {
    %c0_i32 = arith.constant 0 : i32
    %c0_i32_0 = arith.constant 0 : i32
    %c0_i32_1 = arith.constant 0 : i32
    return %c0_i32, %c0_i32_0 : i32, i32
  }
  func.func @transform_11(%arg0: i32, %arg1: i32) -> (i32, i32) {
    %c0_i32 = arith.constant 0 : i32
    %c0_i32_0 = arith.constant 0 : i32
    %c0_i32_1 = arith.constant 0 : i32
    return %c0_i32, %c0_i32_0 : i32, i32
  }
  func.func @transform_12(%arg0: i32, %arg1: i32) -> (i32, i32) {
    %c0_i32 = arith.constant 0 : i32
    %c0_i32_0 = arith.constant 0 : i32
    %c0_i32_1 = arith.constant 0 : i32
    return %c0_i32, %c0_i32_0 : i32, i32
  }
  func.func @transform_13(%arg0: i32, %arg1: i32) -> (i32, i32) {
    %c0_i32 = arith.constant 0 : i32
    %c0_i32_0 = arith.constant 0 : i32
    %c0_i32_1 = arith.constant 0 : i32
    return %c0_i32, %c0_i32_0 : i32, i32
  }
  func.func @transform_14(%arg0: i32, %arg1: i32) -> (i32, i32) {
    %c0_i32 = arith.constant 0 : i32
    %c0_i32_0 = arith.constant 0 : i32
    %c0_i32_1 = arith.constant 0 : i32
    return %c0_i32, %c0_i32_0 : i32, i32
  }
  func.func @transform_15(%arg0: i32, %arg1: i32) -> (i32, i32, i32) {
    %c0_i32 = arith.constant 0 : i32
    %c0_i32_0 = arith.constant 0 : i32
    return %arg0, %arg1, %c0_i32 : i32, i32, i32
  }
}

</mosaic_0001>

<llo_original>
// kernel: tpu_custom_call.1
$region0: #{tpu_custom_call.1}
  #allocation0 [shape = 'u32[]', space=smem, size = 0x4, offset = 0x4, fixed_abs, tag = 'smem constant byte address 0x4 - core index']
  #allocation1 [shape = 'u32[144,128]{1,0:T(1,128)}', space=vmem, size = 0x12000, scoped, tag = 'internal scratch']
  %s0 = inlined_call_operand.vmem [shape: f32[2,8,32], index: 0, kind: input, shape index: {}]
  %s1 = inlined_call_operand.vmem [shape: bf16[32,32], index: 1, kind: input, shape index: {}]
  %s2 = inlined_call_operand.vmem [shape: f32[1,32], index: 2, kind: input, shape index: {}]
  %s3 = inlined_call_operand.vmem [shape: bf16[32,64], index: 3, kind: input, shape index: {}]
  %s4 = inlined_call_operand.vmem [shape: f32[1,64], index: 4, kind: input, shape index: {}]
  %s5 = inlined_call_operand.vmem [shape: bf16[32,32], index: 5, kind: input, shape index: {}]
  %s6 = inlined_call_operand.vmem [shape: f32[1,32], index: 6, kind: input, shape index: {}]
  %s7 = inlined_call_operand.vmem [shape: f32[1,32], index: 7, kind: input, shape index: {}]
  %s8 = inlined_call_operand.vmem [shape: f32[1,32], index: 8, kind: input, shape index: {}]
  %s9 = inlined_call_operand.vmem [shape: f32[1,32], index: 9, kind: input, shape index: {}]
  %s10 = inlined_call_operand.vmem [shape: f32[1,32], index: 10, kind: input, shape index: {}]
  %s11 = inlined_call_operand.vmem [shape: bf16[32,128], index: 11, kind: input, shape index: {}]
  %s12 = inlined_call_operand.hbm [shape: f32[1,128], index: 12, kind: input, shape index: {}]
  %s13 = inlined_call_operand.vmem [shape: bf16[128,32], index: 13, kind: input, shape index: {}]
  %s14 = inlined_call_operand.vmem [shape: f32[1,32], index: 14, kind: input, shape index: {}]
  %s15 = inlined_call_operand.hbm [shape: f32[2,8,32], index: 15, kind: output, shape index: {}]
  %s16 = sld [smem:[#allocation0]]
  $region104: #{tpu_custom_call.1} parent=0
    _
  %s18 = ssub.s32 1, %s16
  %s19 = scalar_select 0, %s18, %s16
  $region1: #{tpu_custom_call.1} parent=0
    #allocation2 [shape = 'u8[512]{0}', space=vmem, size = 0x400, scoped, tag = 'input window, operand 12, single buffered']
    #allocation3 [shape = 's32[2]{0}', space=sflag, size = 0x8, scoped, tag = 'scoped memory for tpu_custom_call.1']
    #allocation4 [shape = 's32[2]{0}', space=sflag, size = 0x8, scoped, tag = 'scoped memory for tpu_custom_call.1']
    #allocation5 [shape = 'u8[8192]{0}', space=vmem, size = 0x2000, scoped, tag = 'output window, operand 0']
    %20 = vsyncpa [#allocation3], 0
    %21 = vsyncpa [#allocation4], 0
    %s22 = scalar_lea.sflag [#allocation4], 1
    %23 = vsyncpa %s22, 0
    loop: start=0, step=1, limit=4
    $region2: #{tpu_custom_call.1} parent=1 // loop_pre_header
      _
    $region3: #{tpu_custom_call.1} parent=1 // loop_header
      %s25 = sphi 0, %s29
      %p26 = scmp.ge.s32.totalorder %s25, 4
      %s32 = sphi 0, %s44
      %s33 = sphi 0, %s40
      %s34 = sphi 0, %s32
      %s35 = sphi 0, %s33
      %s36 = sphi 0, %s34
      %s37 = sphi 0, %s35
      %s47 = sphi 0, %s49
      %s50 = sphi 0, %s47
      %s51 = sphi 0, %s50
      %s67 = sphi 0, %s51
      %s71 = sphi 0, %s71
      %s73 = sphi 0, %s71
      %s74 = sphi 0, %s73
      %s88 = sphi 0, %s74
      %s92 = sphi 0, %s92
      %s94 = sphi 0, %s92
      %s95 = sphi 0, %s94
      %s109 = sphi 0, %s95
      %s113 = sphi 0, %s113
      %s115 = sphi 0, %s113
      %s116 = sphi 0, %s115
      %s130 = sphi 0, %s116
      %s134 = sphi 0, %s134
      %s136 = sphi 0, %s134
      %s137 = sphi 0, %s136
      %s151 = sphi 0, %s137
      %s155 = sphi 0, %s155
      %s157 = sphi 0, %s155
      %s158 = sphi 0, %s157
      %s172 = sphi 0, %s158
      %s176 = sphi 0, %s176
      %s178 = sphi 0, %s176
      %s179 = sphi 0, %s178
      %s193 = sphi 0, %s179
      %s197 = sphi 0, %s197
      %s199 = sphi 0, %s197
      %s200 = sphi 0, %s199
      %s214 = sphi 0, %s200
      %s218 = sphi 0, %s218
      %s220 = sphi 0, %s218
      %s221 = sphi 0, %s220
      %s235 = sphi 0, %s221
      %s239 = sphi 0, %s239
      %s241 = sphi 0, %s239
      %s242 = sphi 0, %s241
      %s256 = sphi 0, %s242
      %s260 = sphi 0, %s260
      %s262 = sphi 0, %s260
      %s263 = sphi 0, %s262
      %s277 = sphi 0, %s263
      %s281 = sphi 0, %s281
      %s283 = sphi 0, %s281
      %s284 = sphi 0, %s283
      %s298 = sphi 0, %s284
      %s302 = sphi 0, %s302
      %s304 = sphi 0, %s302
      %s305 = sphi 0, %s304
      %s319 = sphi 0, %s305
      %s323 = sphi 0, %s323
      %s325 = sphi 0, %s323
      %s326 = sphi 0, %s325
      %s340 = sphi 0, %s326
      %s344 = sphi 0, %s344
      %s346 = sphi 0, %s344
      %s347 = sphi 0, %s346
      %s361 = sphi 0, %s347
      %s369 = sphi 0, %s371
      %s372 = sphi 0, %s369
      %s373 = sphi 0, %s372
      %s389 = sphi 0, %s373
    $region4: #{tpu_custom_call.1} parent=1 // loop_header_branch
      %28 = sbr.rel (%p26) target = $region8
    $region5: #{tpu_custom_call.1} parent=1 // loop_body
      %s30 = ssub.s32 %s25, 1
      %s31 = ssub.s32 %s25, 2
      %s38 = sadd.s32 1, %s33
      %p39 = scmp.ge.s32.totalorder %s38, 1
      %s40 = scalar_select %p39, 0, %s38
      %s41 = sadd.s32 1, %s32
      %s42 = scalar_select %p39, %s41, %s32
      %p43 = scmp.ge.s32.totalorder %s42, 2
      %s44 = scalar_select %p43, 0, %s42
      %s45 = ssub.s32 %s32, %s44
      %p46 = scmp.eq.s32.totalorder %s45, 0
      %s48 = sadd.s32 %s47, 1
      %s49 = scalar_select %p46, %s47, %s48
      %p52 = pneg %p46
      %p53 = scmp.eq.s32.totalorder %s25, 1
      %p54 = por %p52, %p53
      %p55 = scmp.ne.s32.totalorder %s47, %s50
      %p56 = scmp.eq.s32.totalorder %s25, 0
      %p57 = por %p55, %p56
      %p58 = scmp.ne.s32.totalorder %s47, %s50
      %p59 = scmp.eq.s32.totalorder %s30, 1
      %p60 = por %p58, %p59
      %p61 = scmp.ne.s32.totalorder %s50, %s51
      %p62 = scmp.eq.s32.totalorder %s30, 0
      %p63 = por %p61, %p62
      %p64 = scmp.ne.s32.totalorder %s50, %s51
      %p65 = scmp.eq.s32.totalorder %s31, 1
      %p66 = por %p64, %p65
      %p68 = scmp.ne.s32.totalorder %s51, %s67
      %p69 = scmp.eq.s32.totalorder %s31, 0
      %p70 = por %p68, %p69
      %s72 = sadd.s32 %s71, 1
      %p75 = scmp.eq.s32.totalorder %s25, 1
      %p76 = scmp.ne.s32.totalorder %s71, %s73
      %p77 = scmp.eq.s32.totalorder %s25, 0
      %p78 = por %p76, %p77
      %p79 = scmp.ne.s32.totalorder %s71, %s73
      %p80 = scmp.eq.s32.totalorder %s30, 1
      %p81 = por %p79, %p80
      %p82 = scmp.ne.s32.totalorder %s73, %s74
      %p83 = scmp.eq.s32.totalorder %s30, 0
      %p84 = por %p82, %p83
      %p85 = scmp.ne.s32.totalorder %s73, %s74
      %p86 = scmp.eq.s32.totalorder %s31, 1
      %p87 = por %p85, %p86
      %p89 = scmp.ne.s32.totalorder %s74, %s88
      %p90 = scmp.eq.s32.totalorder %s31, 0
      %p91 = por %p89, %p90
      %s93 = sadd.s32 %s92, 1
      %p96 = scmp.eq.s32.totalorder %s25, 1
      %p97 = scmp.ne.s32.totalorder %s92, %s94
      %p98 = scmp.eq.s32.totalorder %s25, 0
      %p99 = por %p97, %p98
      %p100 = scmp.ne.s32.totalorder %s92, %s94
      %p101 = scmp.eq.s32.totalorder %s30, 1
      %p102 = por %p100, %p101
      %p103 = scmp.ne.s32.totalorder %s94, %s95
      %p104 = scmp.eq.s32.totalorder %s30, 0
      %p105 = por %p103, %p104
      %p106 = scmp.ne.s32.totalorder %s94, %s95
      %p107 = scmp.eq.s32.totalorder %s31, 1
      %p108 = por %p106, %p107
      %p110 = scmp.ne.s32.totalorder %s95, %s109
      %p111 = scmp.eq.s32.totalorder %s31, 0
      %p112 = por %p110, %p111
      %s114 = sadd.s32 %s113, 1
      %p117 = scmp.eq.s32.totalorder %s25, 1
      %p118 = scmp.ne.s32.totalorder %s113, %s115
      %p119 = scmp.eq.s32.totalorder %s25, 0
      %p120 = por %p118, %p119
      %p121 = scmp.ne.s32.totalorder %s113, %s115
      %p122 = scmp.eq.s32.totalorder %s30, 1
      %p123 = por %p121, %p122
      %p124 = scmp.ne.s32.totalorder %s115, %s116
      %p125 = scmp.eq.s32.totalorder %s30, 0
      %p126 = por %p124, %p125
      %p127 = scmp.ne.s32.totalorder %s115, %s116
      %p128 = scmp.eq.s32.totalorder %s31, 1
      %p129 = por %p127, %p128
      %p131 = scmp.ne.s32.totalorder %s116, %s130
      %p132 = scmp.eq.s32.totalorder %s31, 0
      %p133 = por %p131, %p132
      %s135 = sadd.s32 %s134, 1
      %p138 = scmp.eq.s32.totalorder %s25, 1
      %p139 = scmp.ne.s32.totalorder %s134, %s136
      %p140 = scmp.eq.s32.totalorder %s25, 0
      %p141 = por %p139, %p140
      %p142 = scmp.ne.s32.totalorder %s134, %s136
      %p143 = scmp.eq.s32.totalorder %s30, 1
      %p144 = por %p142, %p143
      %p145 = scmp.ne.s32.totalorder %s136, %s137
      %p146 = scmp.eq.s32.totalorder %s30, 0
      %p147 = por %p145, %p146
      %p148 = scmp.ne.s32.totalorder %s136, %s137
      %p149 = scmp.eq.s32.totalorder %s31, 1
      %p150 = por %p148, %p149
      %p152 = scmp.ne.s32.totalorder %s137, %s151
      %p153 = scmp.eq.s32.totalorder %s31, 0
      %p154 = por %p152, %p153
      %s156 = sadd.s32 %s155, 1
      %p159 = scmp.eq.s32.totalorder %s25, 1
      %p160 = scmp.ne.s32.totalorder %s155, %s157
      %p161 = scmp.eq.s32.totalorder %s25, 0
      %p162 = por %p160, %p161
      %p163 = scmp.ne.s32.totalorder %s155, %s157
      %p164 = scmp.eq.s32.totalorder %s30, 1
      %p165 = por %p163, %p164
      %p166 = scmp.ne.s32.totalorder %s157, %s158
      %p167 = scmp.eq.s32.totalorder %s30, 0
      %p168 = por %p166, %p167
      %p169 = scmp.ne.s32.totalorder %s157, %s158
      %p170 = scmp.eq.s32.totalorder %s31, 1
      %p171 = por %p169, %p170
      %p173 = scmp.ne.s32.totalorder %s158, %s172
      %p174 = scmp.eq.s32.totalorder %s31, 0
      %p175 = por %p173, %p174
      %s177 = sadd.s32 %s176, 1
      %p180 = scmp.eq.s32.totalorder %s25, 1
      %p181 = scmp.ne.s32.totalorder %s176, %s178
      %p182 = scmp.eq.s32.totalorder %s25, 0
      %p183 = por %p181, %p182
      %p184 = scmp.ne.s32.totalorder %s176, %s178
      %p185 = scmp.eq.s32.totalorder %s30, 1
      %p186 = por %p184, %p185
      %p187 = scmp.ne.s32.totalorder %s178, %s179
      %p188 = scmp.eq.s32.totalorder %s30, 0
      %p189 = por %p187, %p188
      %p190 = scmp.ne.s32.totalorder %s178, %s179
      %p191 = scmp.eq.s32.totalorder %s31, 1
      %p192 = por %p190, %p191
      %p194 = scmp.ne.s32.totalorder %s179, %s193
      %p195 = scmp.eq.s32.totalorder %s31, 0
      %p196 = por %p194, %p195
      %s198 = sadd.s32 %s197, 1
      %p201 = scmp.eq.s32.totalorder %s25, 1
      %p202 = scmp.ne.s32.totalorder %s197, %s199
      %p203 = scmp.eq.s32.totalorder %s25, 0
      %p204 = por %p202, %p203
      %p205 = scmp.ne.s32.totalorder %s197, %s199
      %p206 = scmp.eq.s32.totalorder %s30, 1
      %p207 = por %p205, %p206
      %p208 = scmp.ne.s32.totalorder %s199, %s200
      %p209 = scmp.eq.s32.totalorder %s30, 0
      %p210 = por %p208, %p209
      %p211 = scmp.ne.s32.totalorder %s199, %s200
      %p212 = scmp.eq.s32.totalorder %s31, 1
      %p213 = por %p211, %p212
      %p215 = scmp.ne.s32.totalorder %s200, %s214
      %p216 = scmp.eq.s32.totalorder %s31, 0
      %p217 = por %p215, %p216
      %s219 = sadd.s32 %s218, 1
      %p222 = scmp.eq.s32.totalorder %s25, 1
      %p223 = scmp.ne.s32.totalorder %s218, %s220
      %p224 = scmp.eq.s32.totalorder %s25, 0
      %p225 = por %p223, %p224
      %p226 = scmp.ne.s32.totalorder %s218, %s220
      %p227 = scmp.eq.s32.totalorder %s30, 1
      %p228 = por %p226, %p227
      %p229 = scmp.ne.s32.totalorder %s220, %s221
      %p230 = scmp.eq.s32.totalorder %s30, 0
      %p231 = por %p229, %p230
      %p232 = scmp.ne.s32.totalorder %s220, %s221
      %p233 = scmp.eq.s32.totalorder %s31, 1
      %p234 = por %p232, %p233
      %p236 = scmp.ne.s32.totalorder %s221, %s235
      %p237 = scmp.eq.s32.totalorder %s31, 0
      %p238 = por %p236, %p237
      %s240 = sadd.s32 %s239, 1
      %p243 = scmp.eq.s32.totalorder %s25, 1
      %p244 = scmp.ne.s32.totalorder %s239, %s241
      %p245 = scmp.eq.s32.totalorder %s25, 0
      %p246 = por %p244, %p245
      %p247 = scmp.ne.s32.totalorder %s239, %s241
      %p248 = scmp.eq.s32.totalorder %s30, 1
      %p249 = por %p247, %p248
      %p250 = scmp.ne.s32.totalorder %s241, %s242
      %p251 = scmp.eq.s32.totalorder %s30, 0
      %p252 = por %p250, %p251
      %p253 = scmp.ne.s32.totalorder %s241, %s242
      %p254 = scmp.eq.s32.totalorder %s31, 1
      %p255 = por %p253, %p254
      %p257 = scmp.ne.s32.totalorder %s242, %s256
      %p258 = scmp.eq.s32.totalorder %s31, 0
      %p259 = por %p257, %p258
      %s261 = sadd.s32 %s260, 1
      %p264 = scmp.eq.s32.totalorder %s25, 1
      %p265 = scmp.ne.s32.totalorder %s260, %s262
      %p266 = scmp.eq.s32.totalorder %s25, 0
      %p267 = por %p265, %p266
      %p268 = scmp.ne.s32.totalorder %s260, %s262
      %p269 = scmp.eq.s32.totalorder %s30, 1
      %p270 = por %p268, %p269
      %p271 = scmp.ne.s32.totalorder %s262, %s263
      %p272 = scmp.eq.s32.totalorder %s30, 0
      %p273 = por %p271, %p272
      %p274 = scmp.ne.s32.totalorder %s262, %s263
      %p275 = scmp.eq.s32.totalorder %s31, 1
      %p276 = por %p274, %p275
      %p278 = scmp.ne.s32.totalorder %s263, %s277
      %p279 = scmp.eq.s32.totalorder %s31, 0
      %p280 = por %p278, %p279
      %s282 = sadd.s32 %s281, 1
      %p285 = scmp.eq.s32.totalorder %s25, 1
      %p286 = scmp.ne.s32.totalorder %s281, %s283
      %p287 = scmp.eq.s32.totalorder %s25, 0
      %p288 = por %p286, %p287
      %p289 = scmp.ne.s32.totalorder %s281, %s283
      %p290 = scmp.eq.s32.totalorder %s30, 1
      %p291 = por %p289, %p290
      %p292 = scmp.ne.s32.totalorder %s283, %s284
      %p293 = scmp.eq.s32.totalorder %s30, 0
      %p294 = por %p292, %p293
      %p295 = scmp.ne.s32.totalorder %s283, %s284
      %p296 = scmp.eq.s32.totalorder %s31, 1
      %p297 = por %p295, %p296
      %p299 = scmp.ne.s32.totalorder %s284, %s298
      %p300 = scmp.eq.s32.totalorder %s31, 0
      %p301 = por %p299, %p300
      %s303 = sadd.s32 %s302, 1
      %p306 = scmp.eq.s32.totalorder %s25, 1
      %p307 = scmp.ne.s32.totalorder %s302, %s304
      %p308 = scmp.eq.s32.totalorder %s25, 0
      %p309 = por %p307, %p308
      %p310 = scmp.ne.s32.totalorder %s302, %s304
      %p311 = scmp.eq.s32.totalorder %s30, 1
      %p312 = por %p310, %p311
      %p313 = scmp.ne.s32.totalorder %s304, %s305
      %p314 = scmp.eq.s32.totalorder %s30, 0
      %p315 = por %p313, %p314
      %p316 = scmp.ne.s32.totalorder %s304, %s305
      %p317 = scmp.eq.s32.totalorder %s31, 1
      %p318 = por %p316, %p317
      %p320 = scmp.ne.s32.totalorder %s305, %s319
      %p321 = scmp.eq.s32.totalorder %s31, 0
      %p322 = por %p320, %p321
      %s324 = sadd.s32 %s323, 1
      %p327 = scmp.eq.s32.totalorder %s25, 1
      %p328 = scmp.ne.s32.totalorder %s323, %s325
      %p329 = scmp.eq.s32.totalorder %s25, 0
      %p330 = por %p328, %p329
      %p331 = scmp.ne.s32.totalorder %s323, %s325
      %p332 = scmp.eq.s32.totalorder %s30, 1
      %p333 = por %p331, %p332
      %p334 = scmp.ne.s32.totalorder %s325, %s326
      %p335 = scmp.eq.s32.totalorder %s30, 0
      %p336 = por %p334, %p335
      %p337 = scmp.ne.s32.totalorder %s325, %s326
      %p338 = scmp.eq.s32.totalorder %s31, 1
      %p339 = por %p337, %p338
      %p341 = scmp.ne.s32.totalorder %s326, %s340
      %p342 = scmp.eq.s32.totalorder %s31, 0
      %p343 = por %p341, %p342
      %s345 = sadd.s32 %s344, 1
      %p348 = scmp.eq.s32.totalorder %s25, 1
      %p349 = scmp.ne.s32.totalorder %s344, %s346
      %p350 = scmp.eq.s32.totalorder %s25, 0
      %p351 = por %p349, %p350
      %p352 = scmp.ne.s32.totalorder %s344, %s346
      %p353 = scmp.eq.s32.totalorder %s30, 1
      %p354 = por %p352, %p353
      %p355 = scmp.ne.s32.totalorder %s346, %s347
      %p356 = scmp.eq.s32.totalorder %s30, 0
      %p357 = por %p355, %p356
      %p358 = scmp.ne.s32.totalorder %s346, %s347
      %p359 = scmp.eq.s32.totalorder %s31, 1
      %p360 = por %p358, %p359
      %p362 = scmp.ne.s32.totalorder %s347, %s361
      %p363 = scmp.eq.s32.totalorder %s31, 0
      %p364 = por %p362, %p363
      %s365 = ssub.s32 %s32, %s44
      %s366 = ssub.s32 %s33, %s40
      %s367 = sor.u32 %s365, %s366
      %p368 = scmp.eq.s32.totalorder %s367, 0
      %s370 = sadd.s32 %s369, 1
      %s371 = scalar_select %p368, %s369, %s370
      %p374 = pneg %p368
      %p375 = scmp.eq.s32.totalorder %s25, 1
      %p376 = por %p374, %p375
      %p377 = scmp.ne.s32.totalorder %s369, %s372
      %p378 = scmp.eq.s32.totalorder %s25, 0
      %p379 = por %p377, %p378
      %p380 = scmp.ne.s32.totalorder %s369, %s372
      %p381 = scmp.eq.s32.totalorder %s30, 1
      %p382 = por %p380, %p381
      %p383 = scmp.ne.s32.totalorder %s372, %s373
      %p384 = scmp.eq.s32.totalorder %s30, 0
      %p385 = por %p383, %p384
      %p386 = scmp.ne.s32.totalorder %s372, %s373
      %p387 = scmp.eq.s32.totalorder %s31, 1
      %p388 = por %p386, %p387
      %p390 = scmp.ne.s32.totalorder %s373, %s389
      %p391 = scmp.eq.s32.totalorder %s31, 0
      %p392 = por %p390, %p391
      %p393 = scmp.le.s32.totalorder 1, %s25
      %p394 = scmp.lt.s32.totalorder %s25, 3
      %p395 = pnand %p393, %p394
      %p396 = pneg %p395
      // Predicated region
      $region9: #{tpu_custom_call.1} parent=5 // pred_check
        _
      $region10: #{tpu_custom_call.1} parent=5 // pred_check_branch
        %398 = sbr.rel (%p395) target = $region12
      $region11: #{tpu_custom_call.1} parent=5 // pred_region
        %s399 = ssub.s32 %s25, 1
        // Predicated region
        $region13: #{tpu_custom_call.1} parent=11 // pred_check
          %p400 = pneg %p84
        $region14: #{tpu_custom_call.1} parent=11 // pred_check_branch
          %402 = sbr.rel (%p400) target = $region16
        $region15: #{tpu_custom_call.1} parent=11 // pred_region
          _
        $region16: #{tpu_custom_call.1} parent=11 // pred_fallthru
          _
        // Predicated region
        $region17: #{tpu_custom_call.1} parent=11 // pred_check
          %p403 = pneg %p105
        $region18: #{tpu_custom_call.1} parent=11 // pred_check_branch
          %405 = sbr.rel (%p403) target = $region20
        $region19: #{tpu_custom_call.1} parent=11 // pred_region
          _
        $region20: #{tpu_custom_call.1} parent=11 // pred_fallthru
          _
        // Predicated region
        $region21: #{tpu_custom_call.1} parent=11 // pred_check
          %p406 = pneg %p126
        $region22: #{tpu_custom_call.1} parent=11 // pred_check_branch
          %408 = sbr.rel (%p406) target = $region24
        $region23: #{tpu_custom_call.1} parent=11 // pred_region
          _
        $region24: #{tpu_custom_call.1} parent=11 // pred_fallthru
          _
        // Predicated region
        $region25: #{tpu_custom_call.1} parent=11 // pred_check
          %p409 = pneg %p147
        $region26: #{tpu_custom_call.1} parent=11 // pred_check_branch
          %411 = sbr.rel (%p409) target = $region28
        $region27: #{tpu_custom_call.1} parent=11 // pred_region
          _
        $region28: #{tpu_custom_call.1} parent=11 // pred_fallthru
          _
        // Predicated region
        $region29: #{tpu_custom_call.1} parent=11 // pred_check
          %p412 = pneg %p168
        $region30: #{tpu_custom_call.1} parent=11 // pred_check_branch
          %414 = sbr.rel (%p412) target = $region32
        $region31: #{tpu_custom_call.1} parent=11 // pred_region
          _
        $region32: #{tpu_custom_call.1} parent=11 // pred_fallthru
          _
        // Predicated region
        $region33: #{tpu_custom_call.1} parent=11 // pred_check
          %p415 = pneg %p189
        $region34: #{tpu_custom_call.1} parent=11 // pred_check_branch
          %417 = sbr.rel (%p415) target = $region36
        $region35: #{tpu_custom_call.1} parent=11 // pred_region
          _
        $region36: #{tpu_custom_call.1} parent=11 // pred_fallthru
          _
        // Predicated region
        $region37: #{tpu_custom_call.1} parent=11 // pred_check
          %p418 = pneg %p210
        $region38: #{tpu_custom_call.1} parent=11 // pred_check_branch
          %420 = sbr.rel (%p418) target = $region40
        $region39: #{tpu_custom_call.1} parent=11 // pred_region
          _
        $region40: #{tpu_custom_call.1} parent=11 // pred_fallthru
          _
        // Predicated region
        $region41: #{tpu_custom_call.1} parent=11 // pred_check
          %p421 = pneg %p231
        $region42: #{tpu_custom_call.1} parent=11 // pred_check_branch
          %423 = sbr.rel (%p421) target = $region44
        $region43: #{tpu_custom_call.1} parent=11 // pred_region
          _
        $region44: #{tpu_custom_call.1} parent=11 // pred_fallthru
          _
        // Predicated region
        $region45: #{tpu_custom_call.1} parent=11 // pred_check
          %p424 = pneg %p252
        $region46: #{tpu_custom_call.1} parent=11 // pred_check_branch
          %426 = sbr.rel (%p424) target = $region48
        $region47: #{tpu_custom_call.1} parent=11 // pred_region
          _
        $region48: #{tpu_custom_call.1} parent=11 // pred_fallthru
          _
        // Predicated region
        $region49: #{tpu_custom_call.1} parent=11 // pred_check
          %p427 = pneg %p273
        $region50: #{tpu_custom_call.1} parent=11 // pred_check_branch
          %429 = sbr.rel (%p427) target = $region52
        $region51: #{tpu_custom_call.1} parent=11 // pred_region
          _
        $region52: #{tpu_custom_call.1} parent=11 // pred_fallthru
          _
        // Predicated region
        $region53: #{tpu_custom_call.1} parent=11 // pred_check
          %p430 = pneg %p294
        $region54: #{tpu_custom_call.1} parent=11 // pred_check_branch
          %432 = sbr.rel (%p430) target = $region56
        $region55: #{tpu_custom_call.1} parent=11 // pred_region
          _
        $region56: #{tpu_custom_call.1} parent=11 // pred_fallthru
          _
        // Predicated region
        $region57: #{tpu_custom_call.1} parent=11 // pred_check
          %p433 = pneg %p315
        $region58: #{tpu_custom_call.1} parent=11 // pred_check_branch
          %435 = sbr.rel (%p433) target = $region60
        $region59: #{tpu_custom_call.1} parent=11 // pred_region
          %s437 = ssub.s32 16, 16
          %438 = vsyncadd [#allocation3], %s437
          %s440 = sshll.u32 [#allocation2], 4
          %s441 = int_to_ptr.vmem [resolvable:$true] %s440
          %443 = dma.hbm_to_vmem [thread:$0]  %s12, 16, %s441, [#allocation3]
        $region60: #{tpu_custom_call.1} parent=11 // pred_fallthru
          _
        // Predicated region
        $region61: #{tpu_custom_call.1} parent=11 // pred_check
          %p444 = pneg %p336
        $region62: #{tpu_custom_call.1} parent=11 // pred_check_branch
          %446 = sbr.rel (%p444) target = $region64
        $region63: #{tpu_custom_call.1} parent=11 // pred_region
          _
        $region64: #{tpu_custom_call.1} parent=11 // pred_fallthru
          _
        // Predicated region
        $region65: #{tpu_custom_call.1} parent=11 // pred_check
          %p447 = pneg %p357
        $region66: #{tpu_custom_call.1} parent=11 // pred_check_branch
          %449 = sbr.rel (%p447) target = $region68
        $region67: #{tpu_custom_call.1} parent=11 // pred_region
          _
        $region68: #{tpu_custom_call.1} parent=11 // pred_fallthru
          _
      $region12: #{tpu_custom_call.1} parent=5 // pred_fallthru
        _
      %p450 = scmp.lt.s32.totalorder %s25, 2
      // Predicated region
      $region69: #{tpu_custom_call.1} parent=5 // pred_check
        %p451 = pneg %p450
      $region70: #{tpu_custom_call.1} parent=5 // pred_check_branch
        %453 = sbr.rel (%p451) target = $region72
      $region71: #{tpu_custom_call.1} parent=5 // pred_region
        // Predicated region
        $region73: #{tpu_custom_call.1} parent=71 // pred_check
          %p454 = pneg %p57
        $region74: #{tpu_custom_call.1} parent=71 // pred_check_branch
          %456 = sbr.rel (%p454) target = $region76
        $region75: #{tpu_custom_call.1} parent=71 // pred_region
          %p457 = scmp.lt.s32.totalorder %s32, 1
          %s458 = scalar_select %p457, %s32, 1
          %s459 = smul.addr %s458, 8
          %s460 = scalar_lea.vmem %s0, %s459
        $region76: #{tpu_custom_call.1} parent=71 // pred_fallthru
          _
      $region72: #{tpu_custom_call.1} parent=5 // pred_fallthru
        _
      %p461 = scmp.le.s32.totalorder 1, %s25
      %p462 = scmp.lt.s32.totalorder %s25, 3
      %p463 = pnand %p461, %p462
      %p464 = pneg %p463
      // Predicated region
      $region77: #{tpu_custom_call.1} parent=5 // pred_check
        _
      $region78: #{tpu_custom_call.1} parent=5 // pred_check_branch
        %466 = sbr.rel (%p463) target = $region80
      $region79: #{tpu_custom_call.1} parent=5 // pred_region
        %s467 = ssub.s32 %s25, 1
        // Predicated region
        $region81: #{tpu_custom_call.1} parent=79 // pred_check
          %p468 = pneg %p315
        $region82: #{tpu_custom_call.1} parent=79 // pred_check_branch
          %470 = sbr.rel (%p468) target = $region84
        $region83: #{tpu_custom_call.1} parent=79 // pred_region
          %471 = dma.done [#allocation3], 16
        $region84: #{tpu_custom_call.1} parent=79 // pred_fallthru
          _
        %p472 = scmp.lt.s32.totalorder %s34, 1
        %s473 = scalar_select %p472, %s34, 1
        %s474 = smul.addr %s473, 8
        %s475 = scalar_lea.vmem %s0, %s474
        %p476 = pneg %p63
        %p477 = pneg %p60
        %p478 = pneg %p84
        %p479 = pneg %p81
        %p480 = pneg %p105
        %p481 = pneg %p102
        %p482 = pneg %p126
        %p483 = pneg %p123
        %p484 = pneg %p147
        %p485 = pneg %p144
        %p486 = pneg %p168
        %p487 = pneg %p165
        %p488 = pneg %p189
        %p489 = pneg %p186
        %p490 = pneg %p210
        %p491 = pneg %p207
        %p492 = pneg %p231
        %p493 = pneg %p228
        %p494 = pneg %p252
        %p495 = pneg %p249
        %p496 = pneg %p273
        %p497 = pneg %p270
        %p498 = pneg %p294
        %p499 = pneg %p291
        %p500 = pneg %p315
        %p501 = pneg %p312
        %p502 = pneg %p336
        %p503 = pneg %p333
        %p504 = pneg %p357
        %p505 = pneg %p354
        %p506 = pneg %p385
        %p507 = pneg %p382
        %s508 = sand.u32 %s372, 1
        %s509 = scalar_lea.sflag [#allocation4], %s508
        %s510 = sand.u32 %s372, 1
        %s511 = smul.addr %s510, 8
        %s512 = scalar_lea.vmem [#allocation5], %s511
        %p513 = scmp.lt.s32.totalorder %s34, 1
        %s514 = scalar_select %p513, %s34, 1
        %s515 = smul.addr %s514, 8
        %s516 = scalar_lea.vmem %s0, %s515
        %s518 = smul.u32 %s35, 8
        %s519 = scalar_lea.vmem %s516, %s518
        %v520 = vld [vmem:[%s519] sm:$0xff]
        %v521 = vld [vmem:[%s7] sm:$0x1]
        %v522 = vld [vmem:[%s8] sm:$0x1]
        %vm523 = vcmask 261120
        %v524 = vsel %vm523, %v520, 0.0
        %525 = vadd.xlane.f32.xlu0 %v524
        %v526 = vpop.xlane.xlu0 %525
        %v527 = vrcp.pop 32.0
        %v528 = vmul.f32 %v526, %v527
        %v529 = vsub.f32 %v520, %v528
        %v530 = vmul.f32 %v529, %v529
        %v531 = vsel %vm523, %v530, 0.0
        %532 = vadd.xlane.f32.xlu0 %v531
        %v533 = vpop.xlane.xlu0 %532
        %v534 = vmul.f32 %v533, %v527
        %v535 = vadd.f32 %v534, 1e-05
        %v536 = vrsqrt.pop %v535
        %v537 = vmul.f32 %v529, %v536
        %v539 = vlaneseq
        %v540 = vshrl.u32 %v539, 7
        %v541 = vsub.s32 0, %v540
        %v542 = vrot.slane %v521, %v541
        %v544 = vmul.f32 %v537, %v542
        %v546 = vlaneseq
        %v547 = vshrl.u32 %v546, 7
        %v548 = vsub.s32 0, %v547
        %v549 = vrot.slane %v522, %v548
        %v551 = vadd.f32 %v544, %v549
        %v552 = vpack.c.bf16 %v551, %v551
        %v553 = vld [vmem:[%s1] sm:$0xf]
        %v554 = vld [vmem:[%s1 + $0x4] sm:$0xf]
        %v555 = vld [vmem:[%s1 + $0x8] sm:$0xf]
        %v556 = vld [vmem:[%s1 + $0xc] sm:$0xf]
        %v557 = vld [vmem:[%s2] sm:$0x1]
        %v559 = vlaneseq
        %v560 = vshrl.u32 %v559, 7
        %v561 = vsub.s32 0, %v560
        %v562 = vrot.slane %v557, %v561
        %v568 = vunpack.c.l.b16 %v553
        %v569 = vunpack.c.l.b16 %v554
        %v570 = vunpack.c.l.b16 %v555
        %v571 = vunpack.c.l.b16 %v556
        %v572 = vpack.c.b16 %v569, %v568
        %v573 = vpack.c.b16 %v571, %v570
        %v577 = vsel %vm523, %v552, 0
        %579 = vmatprep.subr.bf16.mxu0 0
        %580 = vmatpush1.bf16.msra.mxu0 0
        %581 = vmatprep.subr.bf16.mxu0 0
        %582 = vmatpush1.bf16.msra.mxu0 0
        %583 = vmatprep.subr.bf16.mxu0 0
        %584 = vmatpush1.bf16.msra.mxu0 0
        %585 = vmatprep.subr.bf16.mxu0 0
        %586 = vmatpush1.bf16.msra.mxu0 0
        %587 = vmatprep.subr.bf16.mxu0 0
        %588 = vmatpush1.bf16.msra.mxu0 0
        %589 = vmatprep.subr.bf16.mxu0 0
        %590 = vmatpush1.bf16.msra.mxu0 0
        %591 = vmatprep.subr.bf16.mxu0 0
        %592 = vmatpush1.bf16.msra.mxu0 %v573
        %593 = vmatprep.subr.bf16.mxu0 0
        %594 = vmatpush1.bf16.msra.mxu0 %v572
        %595 = vmatprep.subr.bf16.mxu0 0
        %596 = vmatpush2.bf16.msra.mxu0 0
        %597 = vmatprep.subr.bf16.mxu0 0
        %598 = vmatpush2.bf16.msra.mxu0 0
        %599 = vmatprep.subr.bf16.mxu0 0
        %600 = vmatpush2.bf16.msra.mxu0 0
        %601 = vmatprep.subr.bf16.mxu0 0
        %602 = vmatpush2.bf16.msra.mxu0 0
        %603 = vmatprep.subr.bf16.mxu0 0
        %604 = vmatpush2.bf16.msra.mxu0 0
        %605 = vmatprep.subr.bf16.mxu0 0
        %606 = vmatpush2.bf16.msra.mxu0 0
        %607 = vmatprep.subr.bf16.mxu0 0
        %608 = vmatpush2.bf16.msra.mxu0 0
        %609 = vmatprep.subr.bf16.mxu0 0
        %610 = vmatpush2.bf16.msra.mxu0 0
        %611 = vmatprep.mubr.bf16.mxu0 0
        %612 = vmatmul.mubr.bf16.gmra.mxu0 %v577
        %v613 = vpop.f32.mrf.mxu0
        %v614 = vadd.f32 %v562, %v613
        %v615 = vpop.f32.mrf.mxu0
        %v616 = vpop.f32.mrf.mxu0
        %v617 = vpop.f32.mrf.mxu0
        %618 = vdwg.mxu0
        %v619 = vpack.c.bf16 %v614, %v614
        %621 = vrot.lane.b32.xlu0 %v619, 120
        %v622 = vpop.permute.xlu0 %621
        %623 = vrot.lane.b32.xlu0 %v619, 112
        %v624 = vpop.permute.xlu0 %623
        %625 = vrot.lane.b32.xlu0 %v619, 104
        %v626 = vpop.permute.xlu0 %625
        %v627 = vlaneseq
        %v628 = vshrl.u32 %v627, 7
        %v629 = vlaneseq
        %v630 = vand.u32 %v629, 127
        %s631 = sadd.s32 %s35, 1
        // While loop
        $region85: #{tpu_custom_call.1} parent=79 // loop_pre_header
          _
        $region86: #{tpu_custom_call.1} parent=79 // loop_header
          %s633 = sphi 0, %s635
          %p634 = scmp.ge.s32.totalorder %s633, %s631
          %v638 = vphi -inf, %v969
          %v639 = vphi -inf, %v970
          %v640 = vphi -inf, %v971
          %v641 = vphi -inf, %v972
          %v642 = vphi 0.0, %v1013
          %v643 = vphi 0.0, %v1014
          %v644 = vphi 0.0, %v1015
          %v645 = vphi 0.0, %v1016
          %v646 = vphi 0.0, %v1218
          %v647 = vphi 0.0, %v1219
          %v648 = vphi 0.0, %v1220
          %v649 = vphi 0.0, %v1221
        $region87: #{tpu_custom_call.1} parent=79 // loop_header_branch
          %637 = sbr.rel (%p634) target = $region91
        $region88: #{tpu_custom_call.1} parent=79 // loop_body
          %s650 = smul.u32 %s633, 8
          %s651 = scalar_lea.vmem %s516, %s650
          %v652 = vld [vmem:[%s651] sm:$0xff]
          %v653 = vld [vmem:[%s7] sm:$0x1]
          %v654 = vld [vmem:[%s8] sm:$0x1]
          %v655 = vsel %vm523, %v652, 0.0
          %656 = vadd.xlane.f32.xlu0 %v655
          %v657 = vpop.xlane.xlu0 %656
          %v658 = vmul.f32 %v657, %v527
          %v659 = vsub.f32 %v652, %v658
          %v660 = vmul.f32 %v659, %v659
          %v661 = vsel %vm523, %v660, 0.0
          %662 = vadd.xlane.f32.xlu0 %v661
          %v663 = vpop.xlane.xlu0 %662
          %v664 = vmul.f32 %v663, %v527
          %v665 = vadd.f32 %v664, 1e-05
          %v666 = vrsqrt.pop %v665
          %v667 = vmul.f32 %v659, %v666
          %v669 = vlaneseq
          %v670 = vshrl.u32 %v669, 7
          %v671 = vsub.s32 0, %v670
          %v672 = vrot.slane %v653, %v671
          %v674 = vmul.f32 %v667, %v672
          %v676 = vlaneseq
          %v677 = vshrl.u32 %v676, 7
          %v678 = vsub.s32 0, %v677
          %v679 = vrot.slane %v654, %v678
          %v681 = vadd.f32 %v674, %v679
          %v682 = vpack.c.bf16 %v681, %v681
          %v683 = vld [vmem:[%s3] sm:$0xf]
          %v684 = vld [vmem:[%s3 + $0x4] sm:$0xf]
          %v685 = vld [vmem:[%s3 + $0x8] sm:$0xf]
          %v686 = vld [vmem:[%s3 + $0xc] sm:$0xf]
          %v687 = vld [vmem:[%s4] sm:$0x1]
          %v689 = vlaneseq
          %v690 = vshrl.u32 %v689, 7
          %v691 = vsub.s32 0, %v690
          %v692 = vrot.slane %v687, %v691
          %v698 = vunpack.c.l.b16 %v683
          %v699 = vunpack.c.l.b16 %v684
          %v700 = vunpack.c.l.b16 %v685
          %v701 = vunpack.c.l.b16 %v686
          %v702 = vpack.c.b16 %v699, %v698
          %v703 = vpack.c.b16 %v701, %v700
          %v707 = vsel %vm523, %v682, 0
          %709 = vmatprep.subr.bf16.mxu0 0
          %710 = vmatpush1.bf16.msra.mxu0 0
          %711 = vmatprep.subr.bf16.mxu0 0
          %712 = vmatpush1.bf16.msra.mxu0 0
          %713 = vmatprep.subr.bf16.mxu0 0
          %714 = vmatpush1.bf16.msra.mxu0 0
          %715 = vmatprep.subr.bf16.mxu0 0
          %716 = vmatpush1.bf16.msra.mxu0 0
          %717 = vmatprep.subr.bf16.mxu0 0
          %718 = vmatpush1.bf16.msra.mxu0 0
          %719 = vmatprep.subr.bf16.mxu0 0
          %720 = vmatpush1.bf16.msra.mxu0 0
          %721 = vmatprep.subr.bf16.mxu0 0
          %722 = vmatpush1.bf16.msra.mxu0 %v703
          %723 = vmatprep.subr.bf16.mxu0 0
          %724 = vmatpush1.bf16.msra.mxu0 %v702
          %725 = vmatprep.subr.bf16.mxu0 0
          %726 = vmatpush2.bf16.msra.mxu0 0
          %727 = vmatprep.subr.bf16.mxu0 0
          %728 = vmatpush2.bf16.msra.mxu0 0
          %729 = vmatprep.subr.bf16.mxu0 0
          %730 = vmatpush2.bf16.msra.mxu0 0
          %731 = vmatprep.subr.bf16.mxu0 0
          %732 = vmatpush2.bf16.msra.mxu0 0
          %733 = vmatprep.subr.bf16.mxu0 0
          %734 = vmatpush2.bf16.msra.mxu0 0
          %735 = vmatprep.subr.bf16.mxu0 0
          %736 = vmatpush2.bf16.msra.mxu0 0
          %737 = vmatprep.subr.bf16.mxu0 0
          %738 = vmatpush2.bf16.msra.mxu0 0
          %739 = vmatprep.subr.bf16.mxu0 0
          %740 = vmatpush2.bf16.msra.mxu0 0
          %741 = vmatprep.mubr.bf16.mxu0 0
          %742 = vmatmul.mubr.bf16.gmra.mxu0 %v707
          %v743 = vpop.f32.mrf.mxu0
          %v744 = vadd.f32 %v692, %v743
          %v745 = vpop.f32.mrf.mxu0
          %v746 = vpop.f32.mrf.mxu0
          %v747 = vpop.f32.mrf.mxu0
          %748 = vdwg.mxu0
          %v749 = vpack.c.bf16 %v744, %v744
          %751 = vrot.lane.b32.xlu0 %v749, 120
          %v752 = vpop.permute.xlu0 %751
          %753 = vrot.lane.b32.xlu0 %v749, 112
          %v754 = vpop.permute.xlu0 %753
          %755 = vrot.lane.b32.xlu0 %v749, 104
          %v756 = vpop.permute.xlu0 %755
          %vm757 = vcmask 64512
          %v759 = vsel %vm757, %v619, 0
          %v762 = vsel %vm757, %v749, 0
          %764 = vmatprep.subr.bf16.mxu0 0
          %765 = vmatpush1.bf16.xpose.msra.mxu0 0
          %766 = vmatprep.subr.bf16.mxu0 0
          %767 = vmatpush1.bf16.xpose.msra.mxu0 0
          %768 = vmatprep.subr.bf16.mxu0 0
          %769 = vmatpush1.bf16.xpose.msra.mxu0 0
          %770 = vmatprep.subr.bf16.mxu0 0
          %771 = vmatpush1.bf16.xpose.msra.mxu0 0
          %772 = vmatprep.subr.bf16.mxu0 0
          %773 = vmatpush1.bf16.xpose.msra.mxu0 0
          %774 = vmatprep.subr.bf16.mxu0 0
          %775 = vmatpush1.bf16.xpose.msra.mxu0 0
          %776 = vmatprep.subr.bf16.mxu0 0
          %777 = vmatpush1.bf16.xpose.msra.mxu0 0
          %778 = vmatprep.subr.bf16.mxu0 0
          %779 = vmatpush1.bf16.xpose.msra.mxu0 %v762
          %780 = vmatprep.subr.bf16.mxu0 0
          %781 = vmatpush2.bf16.xpose.msra.mxu0 0
          %782 = vmatprep.subr.bf16.mxu0 0
          %783 = vmatpush2.bf16.xpose.msra.mxu0 0
          %784 = vmatprep.subr.bf16.mxu0 0
          %785 = vmatpush2.bf16.xpose.msra.mxu0 0
          %786 = vmatprep.subr.bf16.mxu0 0
          %787 = vmatpush2.bf16.xpose.msra.mxu0 0
          %788 = vmatprep.subr.bf16.mxu0 0
          %789 = vmatpush2.bf16.xpose.msra.mxu0 0
          %790 = vmatprep.subr.bf16.mxu0 0
          %791 = vmatpush2.bf16.xpose.msra.mxu0 0
          %792 = vmatprep.subr.bf16.mxu0 0
          %793 = vmatpush2.bf16.xpose.msra.mxu0 0
          %794 = vmatprep.subr.bf16.mxu0 0
          %795 = vmatpush2.bf16.xpose.msra.mxu0 0
          %796 = vmatprep.mubr.bf16.mxu0 0
          %797 = vmatmul.mubr.bf16.gmra.mxu0 %v759
          %v798 = vpop.f32.mrf.mxu0
          %v799 = vadd.f32 0.0, %v798
          %v800 = vpop.f32.mrf.mxu0
          %v801 = vpop.f32.mrf.mxu0
          %v802 = vpop.f32.mrf.mxu0
          %803 = vdwg.mxu0
          %v805 = vsel %vm757, %v622, 0
          %v808 = vsel %vm757, %v752, 0
          %810 = vmatprep.subr.bf16.mxu0 0
          %811 = vmatpush1.bf16.xpose.msra.mxu0 0
          %812 = vmatprep.subr.bf16.mxu0 0
          %813 = vmatpush1.bf16.xpose.msra.mxu0 0
          %814 = vmatprep.subr.bf16.mxu0 0
          %815 = vmatpush1.bf16.xpose.msra.mxu0 0
          %816 = vmatprep.subr.bf16.mxu0 0
          %817 = vmatpush1.bf16.xpose.msra.mxu0 0
          %818 = vmatprep.subr.bf16.mxu0 0
          %819 = vmatpush1.bf16.xpose.msra.mxu0 0
          %820 = vmatprep.subr.bf16.mxu0 0
          %821 = vmatpush1.bf16.xpose.msra.mxu0 0
          %822 = vmatprep.subr.bf16.mxu0 0
          %823 = vmatpush1.bf16.xpose.msra.mxu0 0
          %824 = vmatprep.subr.bf16.mxu0 0
          %825 = vmatpush1.bf16.xpose.msra.mxu0 %v808
          %826 = vmatprep.subr.bf16.mxu0 0
          %827 = vmatpush2.bf16.xpose.msra.mxu0 0
          %828 = vmatprep.subr.bf16.mxu0 0
          %829 = vmatpush2.bf16.xpose.msra.mxu0 0
          %830 = vmatprep.subr.bf16.mxu0 0
          %831 = vmatpush2.bf16.xpose.msra.mxu0 0
          %832 = vmatprep.subr.bf16.mxu0 0
          %833 = vmatpush2.bf16.xpose.msra.mxu0 0
          %834 = vmatprep.subr.bf16.mxu0 0
          %835 = vmatpush2.bf16.xpose.msra.mxu0 0
          %836 = vmatprep.subr.bf16.mxu0 0
          %837 = vmatpush2.bf16.xpose.msra.mxu0 0
          %838 = vmatprep.subr.bf16.mxu0 0
          %839 = vmatpush2.bf16.xpose.msra.mxu0 0
          %840 = vmatprep.subr.bf16.mxu0 0
          %841 = vmatpush2.bf16.xpose.msra.mxu0 0
          %842 = vmatprep.mubr.bf16.mxu0 0
          %843 = vmatmul.mubr.bf16.gmra.mxu0 %v805
          %v844 = vpop.f32.mrf.mxu0
          %v845 = vadd.f32 0.0, %v844
          %v846 = vpop.f32.mrf.mxu0
          %v847 = vpop.f32.mrf.mxu0
          %v848 = vpop.f32.mrf.mxu0
          %849 = vdwg.mxu0
          %v851 = vsel %vm757, %v624, 0
          %v854 = vsel %vm757, %v754, 0
          %856 = vmatprep.subr.bf16.mxu0 0
          %857 = vmatpush1.bf16.xpose.msra.mxu0 0
          %858 = vmatprep.subr.bf16.mxu0 0
          %859 = vmatpush1.bf16.xpose.msra.mxu0 0
          %860 = vmatprep.subr.bf16.mxu0 0
          %861 = vmatpush1.bf16.xpose.msra.mxu0 0
          %862 = vmatprep.subr.bf16.mxu0 0
          %863 = vmatpush1.bf16.xpose.msra.mxu0 0
          %864 = vmatprep.subr.bf16.mxu0 0
          %865 = vmatpush1.bf16.xpose.msra.mxu0 0
          %866 = vmatprep.subr.bf16.mxu0 0
          %867 = vmatpush1.bf16.xpose.msra.mxu0 0
          %868 = vmatprep.subr.bf16.mxu0 0
          %869 = vmatpush1.bf16.xpose.msra.mxu0 0
          %870 = vmatprep.subr.bf16.mxu0 0
          %871 = vmatpush1.bf16.xpose.msra.mxu0 %v854
          %872 = vmatprep.subr.bf16.mxu0 0
          %873 = vmatpush2.bf16.xpose.msra.mxu0 0
          %874 = vmatprep.subr.bf16.mxu0 0
          %875 = vmatpush2.bf16.xpose.msra.mxu0 0
          %876 = vmatprep.subr.bf16.mxu0 0
          %877 = vmatpush2.bf16.xpose.msra.mxu0 0
          %878 = vmatprep.subr.bf16.mxu0 0
          %879 = vmatpush2.bf16.xpose.msra.mxu0 0
          %880 = vmatprep.subr.bf16.mxu0 0
          %881 = vmatpush2.bf16.xpose.msra.mxu0 0
          %882 = vmatprep.subr.bf16.mxu0 0
          %883 = vmatpush2.bf16.xpose.msra.mxu0 0
          %884 = vmatprep.subr.bf16.mxu0 0
          %885 = vmatpush2.bf16.xpose.msra.mxu0 0
          %886 = vmatprep.subr.bf16.mxu0 0
          %887 = vmatpush2.bf16.xpose.msra.mxu0 0
          %888 = vmatprep.mubr.bf16.mxu0 0
          %889 = vmatmul.mubr.bf16.gmra.mxu0 %v851
          %v890 = vpop.f32.mrf.mxu0
          %v891 = vadd.f32 0.0, %v890
          %v892 = vpop.f32.mrf.mxu0
          %v893 = vpop.f32.mrf.mxu0
          %v894 = vpop.f32.mrf.mxu0
          %895 = vdwg.mxu0
          %v897 = vsel %vm757, %v626, 0
          %v900 = vsel %vm757, %v756, 0
          %902 = vmatprep.subr.bf16.mxu0 0
          %903 = vmatpush1.bf16.xpose.msra.mxu0 0
          %904 = vmatprep.subr.bf16.mxu0 0
          %905 = vmatpush1.bf16.xpose.msra.mxu0 0
          %906 = vmatprep.subr.bf16.mxu0 0
          %907 = vmatpush1.bf16.xpose.msra.mxu0 0
          %908 = vmatprep.subr.bf16.mxu0 0
          %909 = vmatpush1.bf16.xpose.msra.mxu0 0
          %910 = vmatprep.subr.bf16.mxu0 0
          %911 = vmatpush1.bf16.xpose.msra.mxu0 0
          %912 = vmatprep.subr.bf16.mxu0 0
          %913 = vmatpush1.bf16.xpose.msra.mxu0 0
          %914 = vmatprep.subr.bf16.mxu0 0
          %915 = vmatpush1.bf16.xpose.msra.mxu0 0
          %916 = vmatprep.subr.bf16.mxu0 0
          %917 = vmatpush1.bf16.xpose.msra.mxu0 %v900
          %918 = vmatprep.subr.bf16.mxu0 0
          %919 = vmatpush2.bf16.xpose.msra.mxu0 0
          %920 = vmatprep.subr.bf16.mxu0 0
          %921 = vmatpush2.bf16.xpose.msra.mxu0 0
          %922 = vmatprep.subr.bf16.mxu0 0
          %923 = vmatpush2.bf16.xpose.msra.mxu0 0
          %924 = vmatprep.subr.bf16.mxu0 0
          %925 = vmatpush2.bf16.xpose.msra.mxu0 0
          %926 = vmatprep.subr.bf16.mxu0 0
          %927 = vmatpush2.bf16.xpose.msra.mxu0 0
          %928 = vmatprep.subr.bf16.mxu0 0
          %929 = vmatpush2.bf16.xpose.msra.mxu0 0
          %930 = vmatprep.subr.bf16.mxu0 0
          %931 = vmatpush2.bf16.xpose.msra.mxu0 0
          %932 = vmatprep.subr.bf16.mxu0 0
          %933 = vmatpush2.bf16.xpose.msra.mxu0 0
          %934 = vmatprep.mubr.bf16.mxu0 0
          %935 = vmatmul.mubr.bf16.gmra.mxu0 %v897
          %v936 = vpop.f32.mrf.mxu0
          %v937 = vadd.f32 0.0, %v936
          %v938 = vpop.f32.mrf.mxu0
          %v939 = vpop.f32.mrf.mxu0
          %v940 = vpop.f32.mrf.mxu0
          %941 = vdwg.mxu0
          %v942 = vmul.f32 %v799, 0.35355338
          %v943 = vmul.f32 %v845, 0.35355338
          %v944 = vmul.f32 %v891, 0.35355338
          %v945 = vmul.f32 %v937, 0.35355338
          %v946 = vstv %s650
          %v947 = vadd.s32 %v946, %v630
          %v948 = vstv %s518
          %v949 = vadd.s32 %v948, %v628
          %vm950 = vcmp.le.s32.totalorder %v947, %v949
          %v951 = vsel %vm950, 1, 0
          %vm952 = vcmp.eq.s32.totalorder %v951, 1
          %v953 = vsel %vm952, %v942, -inf
          %v954 = vsel %vm952, %v943, -inf
          %v955 = vsel %vm952, %v944, -inf
          %v956 = vsel %vm952, %v945, -inf
          %v957 = vsel %vm757, %v953, -inf
          %958 = vmax.xlane.f32.xlu0 %v957
          %v959 = vpop.xlane.xlu0 %958
          %v960 = vsel %vm757, %v954, -inf
          %961 = vmax.xlane.f32.xlu0 %v960
          %v962 = vpop.xlane.xlu0 %961
          %v963 = vsel %vm757, %v955, -inf
          %964 = vmax.xlane.f32.xlu0 %v963
          %v965 = vpop.xlane.xlu0 %964
          %v966 = vsel %vm757, %v956, -inf
          %967 = vmax.xlane.f32.xlu0 %v966
          %v968 = vpop.xlane.xlu0 %967
          %v969 = vmax.f32 %v638, %v959
          %v970 = vmax.f32 %v639, %v962
          %v971 = vmax.f32 %v640, %v965
          %v972 = vmax.f32 %v641, %v968
          %v973 = vsub.f32 %v638, %v969
          %v974 = vsub.f32 %v639, %v970
          %v975 = vsub.f32 %v640, %v971
          %v976 = vsub.f32 %v641, %v972
          %v977 = vmul.f32 %v973, 1.442695
          %v978 = vpow.pop %v977
          %v979 = vmul.f32 %v974, 1.442695
          %v980 = vpow.pop %v979
          %v981 = vmul.f32 %v975, 1.442695
          %v982 = vpow.pop %v981
          %v983 = vmul.f32 %v976, 1.442695
          %v984 = vpow.pop %v983
          %v985 = vsub.f32 %v953, %v969
          %v986 = vsub.f32 %v954, %v970
          %v987 = vsub.f32 %v955, %v971
          %v988 = vsub.f32 %v956, %v972
          %v989 = vmul.f32 %v985, 1.442695
          %v990 = vpow.pop %v989
          %v991 = vmul.f32 %v986, 1.442695
          %v992 = vpow.pop %v991
          %v993 = vmul.f32 %v987, 1.442695
          %v994 = vpow.pop %v993
          %v995 = vmul.f32 %v988, 1.442695
          %v996 = vpow.pop %v995
          %v997 = vmul.f32 %v978, %v642
          %v998 = vmul.f32 %v980, %v643
          %v999 = vmul.f32 %v982, %v644
          %v1000 = vmul.f32 %v984, %v645
          %v1001 = vsel %vm757, %v990, 0.0
          %1002 = vadd.xlane.f32.xlu0 %v1001
          %v1003 = vpop.xlane.xlu0 %1002
          %v1004 = vsel %vm757, %v992, 0.0
          %1005 = vadd.xlane.f32.xlu0 %v1004
          %v1006 = vpop.xlane.xlu0 %1005
          %v1007 = vsel %vm757, %v994, 0.0
          %1008 = vadd.xlane.f32.xlu0 %v1007
          %v1009 = vpop.xlane.xlu0 %1008
          %v1010 = vsel %vm757, %v996, 0.0
          %1011 = vadd.xlane.f32.xlu0 %v1010
          %v1012 = vpop.xlane.xlu0 %1011
          %v1013 = vadd.f32 %v997, %v1003
          %v1014 = vadd.f32 %v998, %v1006
          %v1015 = vadd.f32 %v999, %v1009
          %v1016 = vadd.f32 %v1000, %v1012
          %v1017 = vpack.c.bf16 %v990, %v990
          %v1018 = vpack.c.bf16 %v992, %v992
          %v1019 = vpack.c.bf16 %v994, %v994
          %v1020 = vpack.c.bf16 %v996, %v996
          %1021 = vrot.lane.b32.xlu0 %v749, 96
          %v1022 = vpop.permute.xlu0 %1021
          %v1024 = vsel %vm757, %v1017, 0
          %vm1026 = vcmask 1043456
          %v1028 = vsel %vm1026, %v1022, 0
          %1030 = vmatprep.subr.bf16.mxu0 0
          %1031 = vmatpush1.bf16.msra.mxu0 0
          %1032 = vmatprep.subr.bf16.mxu0 0
          %1033 = vmatpush1.bf16.msra.mxu0 0
          %1034 = vmatprep.subr.bf16.mxu0 0
          %1035 = vmatpush1.bf16.msra.mxu0 0
          %1036 = vmatprep.subr.bf16.mxu0 0
          %1037 = vmatpush1.bf16.msra.mxu0 0
          %1038 = vmatprep.subr.bf16.mxu0 0
          %1039 = vmatpush1.bf16.msra.mxu0 0
          %1040 = vmatprep.subr.bf16.mxu0 0
          %1041 = vmatpush1.bf16.msra.mxu0 0
          %1042 = vmatprep.subr.bf16.mxu0 0
          %1043 = vmatpush1.bf16.msra.mxu0 0
          %1044 = vmatprep.subr.bf16.mxu0 0
          %1045 = vmatpush1.bf16.msra.mxu0 %v1028
          %1046 = vmatprep.subr.bf16.mxu0 0
          %1047 = vmatpush2.bf16.msra.mxu0 0
          %1048 = vmatprep.subr.bf16.mxu0 0
          %1049 = vmatpush2.bf16.msra.mxu0 0
          %1050 = vmatprep.subr.bf16.mxu0 0
          %1051 = vmatpush2.bf16.msra.mxu0 0
          %1052 = vmatprep.subr.bf16.mxu0 0
          %1053 = vmatpush2.bf16.msra.mxu0 0
          %1054 = vmatprep.subr.bf16.mxu0 0
          %1055 = vmatpush2.bf16.msra.mxu0 0
          %1056 = vmatprep.subr.bf16.mxu0 0
          %1057 = vmatpush2.bf16.msra.mxu0 0
          %1058 = vmatprep.subr.bf16.mxu0 0
          %1059 = vmatpush2.bf16.msra.mxu0 0
          %1060 = vmatprep.subr.bf16.mxu0 0
          %1061 = vmatpush2.bf16.msra.mxu0 0
          %1062 = vmatprep.mubr.bf16.mxu0 0
          %1063 = vmatmul.mubr.bf16.gmra.mxu0 %v1024
          %v1064 = vpop.f32.mrf.mxu0
          %v1065 = vadd.f32 0.0, %v1064
          %v1066 = vpop.f32.mrf.mxu0
          %v1067 = vpop.f32.mrf.mxu0
          %v1068 = vpop.f32.mrf.mxu0
          %1069 = vdwg.mxu0
          %1070 = vrot.lane.b32.xlu0 %v752, 96
          %v1071 = vpop.permute.xlu0 %1070
          %v1073 = vsel %vm757, %v1018, 0
          %v1076 = vsel %vm1026, %v1071, 0
          %1078 = vmatprep.subr.bf16.mxu0 0
          %1079 = vmatpush1.bf16.msra.mxu0 0
          %1080 = vmatprep.subr.bf16.mxu0 0
          %1081 = vmatpush1.bf16.msra.mxu0 0
          %1082 = vmatprep.subr.bf16.mxu0 0
          %1083 = vmatpush1.bf16.msra.mxu0 0
          %1084 = vmatprep.subr.bf16.mxu0 0
          %1085 = vmatpush1.bf16.msra.mxu0 0
          %1086 = vmatprep.subr.bf16.mxu0 0
          %1087 = vmatpush1.bf16.msra.mxu0 0
          %1088 = vmatprep.subr.bf16.mxu0 0
          %1089 = vmatpush1.bf16.msra.mxu0 0
          %1090 = vmatprep.subr.bf16.mxu0 0
          %1091 = vmatpush1.bf16.msra.mxu0 0
          %1092 = vmatprep.subr.bf16.mxu0 0
          %1093 = vmatpush1.bf16.msra.mxu0 %v1076
          %1094 = vmatprep.subr.bf16.mxu0 0
          %1095 = vmatpush2.bf16.msra.mxu0 0
          %1096 = vmatprep.subr.bf16.mxu0 0
          %1097 = vmatpush2.bf16.msra.mxu0 0
          %1098 = vmatprep.subr.bf16.mxu0 0
          %1099 = vmatpush2.bf16.msra.mxu0 0
          %1100 = vmatprep.subr.bf16.mxu0 0
          %1101 = vmatpush2.bf16.msra.mxu0 0
          %1102 = vmatprep.subr.bf16.mxu0 0
          %1103 = vmatpush2.bf16.msra.mxu0 0
          %1104 = vmatprep.subr.bf16.mxu0 0
          %1105 = vmatpush2.bf16.msra.mxu0 0
          %1106 = vmatprep.subr.bf16.mxu0 0
          %1107 = vmatpush2.bf16.msra.mxu0 0
          %1108 = vmatprep.subr.bf16.mxu0 0
          %1109 = vmatpush2.bf16.msra.mxu0 0
          %1110 = vmatprep.mubr.bf16.mxu0 0
          %1111 = vmatmul.mubr.bf16.gmra.mxu0 %v1073
          %v1112 = vpop.f32.mrf.mxu0
          %v1113 = vadd.f32 0.0, %v1112
          %v1114 = vpop.f32.mrf.mxu0
          %v1115 = vpop.f32.mrf.mxu0
          %v1116 = vpop.f32.mrf.mxu0
          %1117 = vdwg.mxu0
          %1118 = vrot.lane.b32.xlu0 %v754, 96
          %v1119 = vpop.permute.xlu0 %1118
          %v1121 = vsel %vm757, %v1019, 0
          %v1124 = vsel %vm1026, %v1119, 0
          %1126 = vmatprep.subr.bf16.mxu0 0
          %1127 = vmatpush1.bf16.msra.mxu0 0
          %1128 = vmatprep.subr.bf16.mxu0 0
          %1129 = vmatpush1.bf16.msra.mxu0 0
          %1130 = vmatprep.subr.bf16.mxu0 0
          %1131 = vmatpush1.bf16.msra.mxu0 0
          %1132 = vmatprep.subr.bf16.mxu0 0
          %1133 = vmatpush1.bf16.msra.mxu0 0
          %1134 = vmatprep.subr.bf16.mxu0 0
          %1135 = vmatpush1.bf16.msra.mxu0 0
          %1136 = vmatprep.subr.bf16.mxu0 0
          %1137 = vmatpush1.bf16.msra.mxu0 0
          %1138 = vmatprep.subr.bf16.mxu0 0
          %1139 = vmatpush1.bf16.msra.mxu0 0
          %1140 = vmatprep.subr.bf16.mxu0 0
          %1141 = vmatpush1.bf16.msra.mxu0 %v1124
          %1142 = vmatprep.subr.bf16.mxu0 0
          %1143 = vmatpush2.bf16.msra.mxu0 0
          %1144 = vmatprep.subr.bf16.mxu0 0
          %1145 = vmatpush2.bf16.msra.mxu0 0
          %1146 = vmatprep.subr.bf16.mxu0 0
          %1147 = vmatpush2.bf16.msra.mxu0 0
          %1148 = vmatprep.subr.bf16.mxu0 0
          %1149 = vmatpush2.bf16.msra.mxu0 0
          %1150 = vmatprep.subr.bf16.mxu0 0
          %1151 = vmatpush2.bf16.msra.mxu0 0
          %1152 = vmatprep.subr.bf16.mxu0 0
          %1153 = vmatpush2.bf16.msra.mxu0 0
          %1154 = vmatprep.subr.bf16.mxu0 0
          %1155 = vmatpush2.bf16.msra.mxu0 0
          %1156 = vmatprep.subr.bf16.mxu0 0
          %1157 = vmatpush2.bf16.msra.mxu0 0
          %1158 = vmatprep.mubr.bf16.mxu0 0
          %1159 = vmatmul.mubr.bf16.gmra.mxu0 %v1121
          %v1160 = vpop.f32.mrf.mxu0
          %v1161 = vadd.f32 0.0, %v1160
          %v1162 = vpop.f32.mrf.mxu0
          %v1163 = vpop.f32.mrf.mxu0
          %v1164 = vpop.f32.mrf.mxu0
          %1165 = vdwg.mxu0
          %1166 = vrot.lane.b32.xlu0 %v756, 96
          %v1167 = vpop.permute.xlu0 %1166
          %v1169 = vsel %vm757, %v1020, 0
          %v1172 = vsel %vm1026, %v1167, 0
          %1174 = vmatprep.subr.bf16.mxu0 0
          %1175 = vmatpush1.bf16.msra.mxu0 0
          %1176 = vmatprep.subr.bf16.mxu0 0
          %1177 = vmatpush1.bf16.msra.mxu0 0
          %1178 = vmatprep.subr.bf16.mxu0 0
          %1179 = vmatpush1.bf16.msra.mxu0 0
          %1180 = vmatprep.subr.bf16.mxu0 0
          %1181 = vmatpush1.bf16.msra.mxu0 0
          %1182 = vmatprep.subr.bf16.mxu0 0
          %1183 = vmatpush1.bf16.msra.mxu0 0
          %1184 = vmatprep.subr.bf16.mxu0 0
          %1185 = vmatpush1.bf16.msra.mxu0 0
          %1186 = vmatprep.subr.bf16.mxu0 0
          %1187 = vmatpush1.bf16.msra.mxu0 0
          %1188 = vmatprep.subr.bf16.mxu0 0
          %1189 = vmatpush1.bf16.msra.mxu0 %v1172
          %1190 = vmatprep.subr.bf16.mxu0 0
          %1191 = vmatpush2.bf16.msra.mxu0 0
          %1192 = vmatprep.subr.bf16.mxu0 0
          %1193 = vmatpush2.bf16.msra.mxu0 0
          %1194 = vmatprep.subr.bf16.mxu0 0
          %1195 = vmatpush2.bf16.msra.mxu0 0
          %1196 = vmatprep.subr.bf16.mxu0 0
          %1197 = vmatpush2.bf16.msra.mxu0 0
          %1198 = vmatprep.subr.bf16.mxu0 0
          %1199 = vmatpush2.bf16.msra.mxu0 0
          %1200 = vmatprep.subr.bf16.mxu0 0
          %1201 = vmatpush2.bf16.msra.mxu0 0
          %1202 = vmatprep.subr.bf16.mxu0 0
          %1203 = vmatpush2.bf16.msra.mxu0 0
          %1204 = vmatprep.subr.bf16.mxu0 0
          %1205 = vmatpush2.bf16.msra.mxu0 0
          %1206 = vmatprep.mubr.bf16.mxu0 0
          %1207 = vmatmul.mubr.bf16.gmra.mxu0 %v1169
          %v1208 = vpop.f32.mrf.mxu0
          %v1209 = vadd.f32 0.0, %v1208
          %v1210 = vpop.f32.mrf.mxu0
          %v1211 = vpop.f32.mrf.mxu0
          %v1212 = vpop.f32.mrf.mxu0
          %1213 = vdwg.mxu0
          %v1214 = vmul.f32 %v978, %v646
          %v1215 = vmul.f32 %v980, %v647
          %v1216 = vmul.f32 %v982, %v648
          %v1217 = vmul.f32 %v984, %v649
          %v1218 = vadd.f32 %v1214, %v1065
          %v1219 = vadd.f32 %v1215, %v1113
          %v1220 = vadd.f32 %v1216, %v1161
          %v1221 = vadd.f32 %v1217, %v1209
        $region89: #{tpu_custom_call.1} parent=79 // loop_footer
          %s635 = sadd.s32 %s633, 1
        $region90: #{tpu_custom_call.1} parent=79 // loop_footer_branch
          %632 = sbr.rel target = $region86
        $region91: #{tpu_custom_call.1} parent=79 // loop_exit
          _
        %v1222 = vrcp.pop %v642
        %v1223 = vrcp.pop %v643
        %v1224 = vrcp.pop %v644
        %v1225 = vrcp.pop %v645
        %v1226 = vmul.f32 %v646, %v1222
        %v1227 = vmul.f32 %v647, %v1223
        %v1228 = vmul.f32 %v648, %v1224
        %v1229 = vmul.f32 %v649, %v1225
        %1231 = vrot.lane.b32.xlu0 %v1227, 8
        %v1232 = vpop.permute.xlu0 %1231
        %1235 = vrot.lane.b32.xlu0 %v1228, 16
        %v1236 = vpop.permute.xlu0 %1235
        %1239 = vrot.lane.b32.xlu0 %v1229, 24
        %v1240 = vpop.permute.xlu0 %1239
        %vm1242 = vcmask 64512
        %v1243 = vsel %vm1242, %v1226, %v1232
        %vm1244 = vcmask 130048
        %v1245 = vsel %vm1244, %v1243, %v1236
        %vm1246 = vcmask 195584
        %v1247 = vsel %vm1246, %v1245, %v1240
        %v1248 = vpack.c.bf16 %v1247, %v1247
        %v1249 = vld [vmem:[%s5] sm:$0xf]
        %v1250 = vld [vmem:[%s5 + $0x4] sm:$0xf]
        %v1251 = vld [vmem:[%s5 + $0x8] sm:$0xf]
        %v1252 = vld [vmem:[%s5 + $0xc] sm:$0xf]
        %v1253 = vld [vmem:[%s6] sm:$0x1]
        %v1255 = vlaneseq
        %v1256 = vshrl.u32 %v1255, 7
        %v1257 = vsub.s32 0, %v1256
        %v1258 = vrot.slane %v1253, %v1257
        %v1264 = vunpack.c.l.b16 %v1249
        %v1265 = vunpack.c.l.b16 %v1250
        %v1266 = vunpack.c.l.b16 %v1251
        %v1267 = vunpack.c.l.b16 %v1252
        %v1268 = vpack.c.b16 %v1265, %v1264
        %v1269 = vpack.c.b16 %v1267, %v1266
        %v1273 = vsel %vm523, %v1248, 0
        %1275 = vmatprep.subr.bf16.mxu0 0
        %1276 = vmatpush1.bf16.msra.mxu0 0
        %1277 = vmatprep.subr.bf16.mxu0 0
        %1278 = vmatpush1.bf16.msra.mxu0 0
        %1279 = vmatprep.subr.bf16.mxu0 0
        %1280 = vmatpush1.bf16.msra.mxu0 0
        %1281 = vmatprep.subr.bf16.mxu0 0
        %1282 = vmatpush1.bf16.msra.mxu0 0
        %1283 = vmatprep.subr.bf16.mxu0 0
        %1284 = vmatpush1.bf16.msra.mxu0 0
        %1285 = vmatprep.subr.bf16.mxu0 0
        %1286 = vmatpush1.bf16.msra.mxu0 0
        %1287 = vmatprep.subr.bf16.mxu0 0
        %1288 = vmatpush1.bf16.msra.mxu0 %v1269
        %1289 = vmatprep.subr.bf16.mxu0 0
        %1290 = vmatpush1.bf16.msra.mxu0 %v1268
        %1291 = vmatprep.subr.bf16.mxu0 0
        %1292 = vmatpush2.bf16.msra.mxu0 0
        %1293 = vmatprep.subr.bf16.mxu0 0
        %1294 = vmatpush2.bf16.msra.mxu0 0
        %1295 = vmatprep.subr.bf16.mxu0 0
        %1296 = vmatpush2.bf16.msra.mxu0 0
        %1297 = vmatprep.subr.bf16.mxu0 0
        %1298 = vmatpush2.bf16.msra.mxu0 0
        %1299 = vmatprep.subr.bf16.mxu0 0
        %1300 = vmatpush2.bf16.msra.mxu0 0
        %1301 = vmatprep.subr.bf16.mxu0 0
        %1302 = vmatpush2.bf16.msra.mxu0 0
        %1303 = vmatprep.subr.bf16.mxu0 0
        %1304 = vmatpush2.bf16.msra.mxu0 0
        %1305 = vmatprep.subr.bf16.mxu0 0
        %1306 = vmatpush2.bf16.msra.mxu0 0
        %1307 = vmatprep.mubr.bf16.mxu0 0
        %1308 = vmatmul.mubr.bf16.gmra.mxu0 %v1273
        %v1309 = vpop.f32.mrf.mxu0
        %v1310 = vadd.f32 %v1258, %v1309
        %v1311 = vpop.f32.mrf.mxu0
        %v1312 = vpop.f32.mrf.mxu0
        %v1313 = vpop.f32.mrf.mxu0
        %1314 = vdwg.mxu0
        %v1315 = vadd.f32 %v520, %v1310
        %v1316 = vld [vmem:[%s9] sm:$0x1]
        %v1317 = vld [vmem:[%s10] sm:$0x1]
        %v1318 = vsel %vm523, %v1315, 0.0
        %1319 = vadd.xlane.f32.xlu0 %v1318
        %v1320 = vpop.xlane.xlu0 %1319
        %v1321 = vmul.f32 %v1320, %v527
        %v1322 = vsub.f32 %v1315, %v1321
        %v1323 = vmul.f32 %v1322, %v1322
        %v1324 = vsel %vm523, %v1323, 0.0
        %1325 = vadd.xlane.f32.xlu0 %v1324
        %v1326 = vpop.xlane.xlu0 %1325
        %v1327 = vmul.f32 %v1326, %v527
        %v1328 = vadd.f32 %v1327, 1e-05
        %v1329 = vrsqrt.pop %v1328
        %v1330 = vmul.f32 %v1322, %v1329
        %v1332 = vlaneseq
        %v1333 = vshrl.u32 %v1332, 7
        %v1334 = vsub.s32 0, %v1333
        %v1335 = vrot.slane %v1316, %v1334
        %v1337 = vmul.f32 %v1330, %v1335
        %v1339 = vlaneseq
        %v1340 = vshrl.u32 %v1339, 7
        %v1341 = vsub.s32 0, %v1340
        %v1342 = vrot.slane %v1317, %v1341
        %v1344 = vadd.f32 %v1337, %v1342
        %v1345 = vpack.c.bf16 %v1344, %v1344
        %v1346 = vld [vmem:[%s11] sm:$0xf]
        %v1347 = vld [vmem:[%s11 + $0x4] sm:$0xf]
        %v1348 = vld [vmem:[%s11 + $0x8] sm:$0xf]
        %v1349 = vld [vmem:[%s11 + $0xc] sm:$0xf]
        %v1350 = vld [vmem:[#allocation2] sm:$0x1]
        %v1352 = vlaneseq
        %v1353 = vshrl.u32 %v1352, 7
        %v1354 = vsub.s32 0, %v1353
        %v1355 = vrot.slane %v1350, %v1354
        %v1361 = vunpack.c.l.b16 %v1346
        %v1362 = vunpack.c.l.b16 %v1347
        %v1363 = vunpack.c.l.b16 %v1348
        %v1364 = vunpack.c.l.b16 %v1349
        %v1365 = vpack.c.b16 %v1362, %v1361
        %v1366 = vpack.c.b16 %v1364, %v1363
        %v1370 = vsel %vm523, %v1345, 0
        %1372 = vmatprep.subr.bf16.mxu0 0
        %1373 = vmatpush1.bf16.msra.mxu0 0
        %1374 = vmatprep.subr.bf16.mxu0 0
        %1375 = vmatpush1.bf16.msra.mxu0 0
        %1376 = vmatprep.subr.bf16.mxu0 0
        %1377 = vmatpush1.bf16.msra.mxu0 0
        %1378 = vmatprep.subr.bf16.mxu0 0
        %1379 = vmatpush1.bf16.msra.mxu0 0
        %1380 = vmatprep.subr.bf16.mxu0 0
        %1381 = vmatpush1.bf16.msra.mxu0 0
        %1382 = vmatprep.subr.bf16.mxu0 0
        %1383 = vmatpush1.bf16.msra.mxu0 0
        %1384 = vmatprep.subr.bf16.mxu0 0
        %1385 = vmatpush1.bf16.msra.mxu0 %v1366
        %1386 = vmatprep.subr.bf16.mxu0 0
        %1387 = vmatpush1.bf16.msra.mxu0 %v1365
        %1388 = vmatprep.subr.bf16.mxu0 0
        %1389 = vmatpush2.bf16.msra.mxu0 0
        %1390 = vmatprep.subr.bf16.mxu0 0
        %1391 = vmatpush2.bf16.msra.mxu0 0
        %1392 = vmatprep.subr.bf16.mxu0 0
        %1393 = vmatpush2.bf16.msra.mxu0 0
        %1394 = vmatprep.subr.bf16.mxu0 0
        %1395 = vmatpush2.bf16.msra.mxu0 0
        %1396 = vmatprep.subr.bf16.mxu0 0
        %1397 = vmatpush2.bf16.msra.mxu0 0
        %1398 = vmatprep.subr.bf16.mxu0 0
        %1399 = vmatpush2.bf16.msra.mxu0 0
        %1400 = vmatprep.subr.bf16.mxu0 0
        %1401 = vmatpush2.bf16.msra.mxu0 0
        %1402 = vmatprep.subr.bf16.mxu0 0
        %1403 = vmatpush2.bf16.msra.mxu0 0
        %1404 = vmatprep.mubr.bf16.mxu0 0
        %1405 = vmatmul.mubr.bf16.gmra.mxu0 %v1370
        %v1406 = vpop.f32.mrf.mxu0
        %v1407 = vadd.f32 %v1355, %v1406
        %v1408 = vpop.f32.mrf.mxu0
        %v1409 = vpop.f32.mrf.mxu0
        %v1410 = vpop.f32.mrf.mxu0
        %1411 = vdwg.mxu0
        %v1412 = vmul.f32 %v1407, 0.5
        %v1413 = vmul.f32 %v1407, 0.044715
        %v1414 = vmul.f32 %v1413, %v1407
        %v1415 = vmul.f32 %v1414, %v1407
        %v1416 = vadd.f32 %v1407, %v1415
        %v1417 = vmul.f32 %v1416, 0.7978846
        %v1418 = vtanh.pop %v1417
        %v1419 = vadd.f32 %v1418, 1.0
        %v1420 = vmul.f32 %v1412, %v1419
        %v1421 = vpack.c.bf16 %v1420, %v1420
        %v1422 = vld [vmem:[%s13] sm:$0xf]
        %v1423 = vld [vmem:[%s13 + $0x4] sm:$0xf]
        %v1424 = vld [vmem:[%s13 + $0x8] sm:$0xf]
        %v1425 = vld [vmem:[%s13 + $0xc] sm:$0xf]
        %v1426 = vld [vmem:[%s13 + $0x10] sm:$0xf]
        %v1427 = vld [vmem:[%s13 + $0x14] sm:$0xf]
        %v1428 = vld [vmem:[%s13 + $0x18] sm:$0xf]
        %v1429 = vld [vmem:[%s13 + $0x1c] sm:$0xf]
        %v1430 = vld [vmem:[%s13 + $0x20] sm:$0xf]
        %v1431 = vld [vmem:[%s13 + $0x24] sm:$0xf]
        %v1432 = vld [vmem:[%s13 + $0x28] sm:$0xf]
        %v1433 = vld [vmem:[%s13 + $0x2c] sm:$0xf]
        %v1434 = vld [vmem:[%s13 + $0x30] sm:$0xf]
        %v1435 = vld [vmem:[%s13 + $0x34] sm:$0xf]
        %v1436 = vld [vmem:[%s13 + $0x38] sm:$0xf]
        %v1437 = vld [vmem:[%s13 + $0x3c] sm:$0xf]
        %v1438 = vld [vmem:[%s14] sm:$0x1]
        %v1440 = vlaneseq
        %v1441 = vshrl.u32 %v1440, 7
        %v1442 = vsub.s32 0, %v1441
        %v1443 = vrot.slane %v1438, %v1442
        %v1461 = vunpack.c.l.b16 %v1422
        %v1462 = vunpack.c.l.b16 %v1423
        %v1463 = vunpack.c.l.b16 %v1424
        %v1464 = vunpack.c.l.b16 %v1425
        %v1465 = vunpack.c.l.b16 %v1426
        %v1466 = vunpack.c.l.b16 %v1427
        %v1467 = vunpack.c.l.b16 %v1428
        %v1468 = vunpack.c.l.b16 %v1429
        %v1469 = vunpack.c.l.b16 %v1430
        %v1470 = vunpack.c.l.b16 %v1431
        %v1471 = vunpack.c.l.b16 %v1432
        %v1472 = vunpack.c.l.b16 %v1433
        %v1473 = vunpack.c.l.b16 %v1434
        %v1474 = vunpack.c.l.b16 %v1435
        %v1475 = vunpack.c.l.b16 %v1436
        %v1476 = vunpack.c.l.b16 %v1437
        %v1477 = vpack.c.b16 %v1462, %v1461
        %v1478 = vpack.c.b16 %v1464, %v1463
        %v1479 = vpack.c.b16 %v1466, %v1465
        %v1480 = vpack.c.b16 %v1468, %v1467
        %v1481 = vpack.c.b16 %v1470, %v1469
        %v1482 = vpack.c.b16 %v1472, %v1471
        %v1483 = vpack.c.b16 %v1474, %v1473
        %v1484 = vpack.c.b16 %v1476, %v1475
        %1493 = vmatprep.subr.bf16.mxu0 0
        %1494 = vmatpush1.bf16.msra.mxu0 %v1484
        %1495 = vmatprep.subr.bf16.mxu0 0
        %1496 = vmatpush1.bf16.msra.mxu0 %v1483
        %1497 = vmatprep.subr.bf16.mxu0 0
        %1498 = vmatpush1.bf16.msra.mxu0 %v1482
        %1499 = vmatprep.subr.bf16.mxu0 0
        %1500 = vmatpush1.bf16.msra.mxu0 %v1481
        %1501 = vmatprep.subr.bf16.mxu0 0
        %1502 = vmatpush1.bf16.msra.mxu0 %v1480
        %1503 = vmatprep.subr.bf16.mxu0 0
        %1504 = vmatpush1.bf16.msra.mxu0 %v1479
        %1505 = vmatprep.subr.bf16.mxu0 0
        %1506 = vmatpush1.bf16.msra.mxu0 %v1478
        %1507 = vmatprep.subr.bf16.mxu0 0
        %1508 = vmatpush1.bf16.msra.mxu0 %v1477
        %1509 = vmatprep.subr.bf16.mxu0 0
        %1510 = vmatpush2.bf16.msra.mxu0 0
        %1511 = vmatprep.subr.bf16.mxu0 0
        %1512 = vmatpush2.bf16.msra.mxu0 0
        %1513 = vmatprep.subr.bf16.mxu0 0
        %1514 = vmatpush2.bf16.msra.mxu0 0
        %1515 = vmatprep.subr.bf16.mxu0 0
        %1516 = vmatpush2.bf16.msra.mxu0 0
        %1517 = vmatprep.subr.bf16.mxu0 0
        %1518 = vmatpush2.bf16.msra.mxu0 0
        %1519 = vmatprep.subr.bf16.mxu0 0
        %1520 = vmatpush2.bf16.msra.mxu0 0
        %1521 = vmatprep.subr.bf16.mxu0 0
        %1522 = vmatpush2.bf16.msra.mxu0 0
        %1523 = vmatprep.subr.bf16.mxu0 0
        %1524 = vmatpush2.bf16.msra.mxu0 0
        %1525 = vmatprep.mubr.bf16.mxu0 0
        %1526 = vmatmul.mubr.bf16.gmra.mxu0 %v1421
        %v1527 = vpop.f32.mrf.mxu0
        %v1528 = vadd.f32 %v1443, %v1527
        %v1529 = vpop.f32.mrf.mxu0
        %v1530 = vpop.f32.mrf.mxu0
        %v1531 = vpop.f32.mrf.mxu0
        %1532 = vdwg.mxu0
        %v1533 = vadd.f32 %v1315, %v1528
        %1534 = vst.msk [vmem:[%s512] sm:$0xff] %vm523, %v1533
        %s1535 = sand.u32 %s372, 1
        %s1536 = scalar_lea.sflag [#allocation4], %s1535
        %s1537 = sand.u32 %s372, 1
        %s1538 = smul.addr %s1537, 8
        %s1539 = scalar_lea.vmem [#allocation5], %s1538
        // Predicated region
        $region92: #{tpu_custom_call.1} parent=79 // pred_check
          %p1540 = pneg %p382
        $region93: #{tpu_custom_call.1} parent=79 // pred_check_branch
          %1542 = sbr.rel (%p1540) target = $region95
        $region94: #{tpu_custom_call.1} parent=79 // pred_region
          %s1544 = ssub.s32 128, 128
          %1545 = vsyncadd %s1536, %s1544
          %s1546 = sadd.s32 %s35, %s34
          %s1547 = smul.addr %s1546, 128
          %s1548 = scalar_lea.hbm %s15, %s1547
          %s1550 = sshll.u32 %s1539, 4
          %s1551 = int_to_ptr.vmem [resolvable:$true] %s1550
          %1553 = dma.vmem_to_hbm [thread:$0]  %s1551, 128, %s1548, %s1536
        $region95: #{tpu_custom_call.1} parent=79 // pred_fallthru
          _
      $region80: #{tpu_custom_call.1} parent=5 // pred_fallthru
        _
      %p1554 = scmp.le.s32.totalorder 2, %s25
      // Predicated region
      $region96: #{tpu_custom_call.1} parent=5 // pred_check
        %p1555 = pneg %p1554
      $region97: #{tpu_custom_call.1} parent=5 // pred_check_branch
        %1557 = sbr.rel (%p1555) target = $region99
      $region98: #{tpu_custom_call.1} parent=5 // pred_region
        %s1558 = ssub.s32 %s25, 2
        // Predicated region
        $region100: #{tpu_custom_call.1} parent=98 // pred_check
          %p1559 = pneg %p388
        $region101: #{tpu_custom_call.1} parent=98 // pred_check_branch
          %1561 = sbr.rel (%p1559) target = $region103
        $region102: #{tpu_custom_call.1} parent=98 // pred_region
          %s1562 = sand.u32 %s373, 1
          %s1563 = scalar_lea.sflag [#allocation4], %s1562
          %s1564 = sand.u32 %s373, 1
          %s1565 = smul.addr %s1564, 8
          %s1566 = scalar_lea.vmem [#allocation5], %s1565
          %1567 = dma.done %s1563, 128
        $region103: #{tpu_custom_call.1} parent=98 // pred_fallthru
          _
      $region99: #{tpu_custom_call.1} parent=5 // pred_fallthru
        _
    $region6: #{tpu_custom_call.1} parent=1 // loop_footer
      %s29 = sadd.s32 1, %s25
    $region7: #{tpu_custom_call.1} parent=1 // loop_footer_branch
      %24 = sbr.rel target = $region3
    $region8: #{tpu_custom_call.1} parent=1 // loop_exit
      _
    %1568 = vsyncpa [#allocation3], 1
    %s1569 = scalar_lea.sflag [#allocation3], 1
    %1570 = vsyncpa %s1569, 1
    %1571 = vsyncpa [#allocation4], 1
    %s1572 = scalar_lea.sflag [#allocation4], 1
    %1573 = vsyncpa %s1572, 1

</llo_original>
